<compile_context>
chip_gen: v7x
topology: tpu7x:2x2x1
jax: 0.10.0
libtpu: 0.0.40
codegen_flags: <defaults>
</compile_context>

<pallas_src>
import jax
import jax.numpy as jnp
from jax.experimental import pallas as pl
from jax.experimental.pallas import tpu as pltpu

# ---------------- configuration (small synthetic shapes) ----------------
B, T, D = 2, 8, 32          # batch, time, model size
H_FF = 64                   # feed-forward hidden units
N_HEAD = 4                  # attention heads
D_K = D // N_HEAD
K_CONV = 7                  # depthwise conv kernel size (odd)
PAD = (K_CONV - 1) // 2
LN_EPS = 1e-12              # espnet LayerNorm eps
BN_EPS = 1e-5               # torch BatchNorm1d eps
FF_SCALE = 0.5              # macaron ff scale
NEG_BIG = -1e9              # large finite mask value (safe under any narrowing)

# ------- packed vector-parameter layout: one lane-dense (32, 128) block -------
VEC_W = 128
(R_LN_MAC_G, R_LN_MAC_B, R_MAC_B1, R_MAC_B2,
 R_LN_MHA_G, R_LN_MHA_B, R_B_QKV, R_B_O,
 R_LN_CONV_G, R_LN_CONV_B, R_PW1_B, R_DW_B,
 R_BN_G, R_BN_B, R_BN_M, R_BN_V, R_PW2_B,
 R_LN_FF_G, R_LN_FF_B, R_FF_B1, R_FF_B2,
 R_LN_FIN_G, R_LN_FIN_B) = range(23)
R_DW_W0 = 23                 # rows 23..29 hold the K_CONV depthwise taps
N_VEC_ROWS = 32              # 30 used rows, padded to a sublane multiple

# original (unpacked) parameter shapes — used for init and the pure-JAX reference
PARAM_SHAPES = [
    ("ln_mac_g", (1, D)), ("ln_mac_b", (1, D)),
    ("mac_w1", (D, H_FF)), ("mac_b1", (1, H_FF)),
    ("mac_w2", (H_FF, D)), ("mac_b2", (1, D)),
    ("ln_mha_g", (1, D)), ("ln_mha_b", (1, D)),
    ("wq", (D, D)), ("bq", (1, D)),
    ("wk", (D, D)), ("bk", (1, D)),
    ("wv", (D, D)), ("bv", (1, D)),
    ("wo", (D, D)), ("bo", (1, D)),
    ("ln_conv_g", (1, D)), ("ln_conv_b", (1, D)),
    ("pw1_w", (D, 2 * D)), ("pw1_b", (1, 2 * D)),
    ("dw_w", (K_CONV, D)), ("dw_b", (1, D)),
    ("bn_g", (1, D)), ("bn_b", (1, D)), ("bn_m", (1, D)), ("bn_v", (1, D)),
    ("pw2_w", (D, D)), ("pw2_b", (1, D)),
    ("ln_ff_g", (1, D)), ("ln_ff_b", (1, D)),
    ("ff_w1", (D, H_FF)), ("ff_b1", (1, H_FF)),
    ("ff_w2", (H_FF, D)), ("ff_b2", (1, D)),
    ("ln_fin_g", (1, D)), ("ln_fin_b", (1, D)),
]


# ---------------- shared math helpers (used by kernel and reference) ----------------
def _mm(a, w):
    """MXU matmul: bf16 operands (no-op cast if already bf16), f32 accumulation."""
    return jnp.dot(a.astype(jnp.bfloat16), w.astype(jnp.bfloat16),
                   preferred_element_type=jnp.float32)


def _bmm(pattern, a, b):
    """Batched MXU matmul (einsum): bf16 operands, f32 accumulation."""
    return jnp.einsum(pattern, a.astype(jnp.bfloat16), b.astype(jnp.bfloat16),
                      preferred_element_type=jnp.float32)


def _layer_norm(x, g, b):
    mu = jnp.mean(x, axis=-1, keepdims=True)
    var = jnp.mean(jnp.square(x - mu), axis=-1, keepdims=True)
    return (x - mu) * jax.lax.rsqrt(var + LN_EPS) * g + b


def _swish(x):
    return x * jax.nn.sigmoid(x)


def _ff(x, w1, b1, w2, b2):
    return _mm(_swish(_mm(x, w1) + b1), w2) + b2


# ---------------- Pallas kernel (one grid step = one batch element) ----------------
def encoder_layer_kernel(lens_ref, x_ref, vec_ref,
                         mac_w1_ref, mac_w2_ref, wqkv_ref, wo_ref,
                         pw1_w_ref, pw2_w_ref, ff_w1_ref, ff_w2_ref,
                         o_ref):
    b = pl.program_id(0)
    vec = vec_ref[...]                              # (32, 128) packed vector params

    def vrow(i, w=D):                               # static row slice of the packed block
        return vec[i:i + 1, :w]

    x = x_ref[...].astype(jnp.float32).reshape(T, D)   # this batch element's (T, D) slab

    # ---- macaron feed-forward (half-step): x = x + 0.5 * FF(LN(x)) ----
    xn = _layer_norm(x, vrow(R_LN_MAC_G), vrow(R_LN_MAC_B))
    x = x + FF_SCALE * _ff(xn, mac_w1_ref[...], vrow(R_MAC_B1, H_FF),
                           mac_w2_ref[...], vrow(R_MAC_B2))

    # ---- multi-headed self-attention (all heads in one batched pass) ----
    xn = _layer_norm(x, vrow(R_LN_MHA_G), vrow(R_LN_MHA_B))
    # fused QKV projection; the 1/sqrt(d_k) scale is already folded into Wq/bq host-side
    qkv = _mm(xn, wqkv_ref[...]) + vrow(R_B_QKV, 3 * D)          # (T, 3D)

    def heads_major(z):                             # (T, D) -> (N_HEAD, T, D_K)
        z3 = z.reshape(1, T, D)
        return jnp.concatenate(
            [z3[:, :, h * D_K:(h + 1) * D_K] for h in range(N_HEAD)], axis=0)

    q = heads_major(qkv[:, :D])
    k = heads_major(qkv[:, D:2 * D])
    v = heads_major(qkv[:, 2 * D:])

    # key-validity mask rebuilt from the prefetched length scalar (no mask DMA, no copies)
    t_idx = jax.lax.broadcasted_iota(jnp.int32, (1, 1, T), 2)
    key_valid = t_idx < lens_ref[b]                               # (1, 1, T) -> bcast (H,T,T)

    scores = _bmm('hqd,hkd->hqk', q, k)                           # (H, T, T), pre-scaled
    scores = jnp.where(key_valid, scores, NEG_BIG)
    scores = scores - jnp.max(scores, axis=-1, keepdims=True)
    e = jnp.exp(scores)
    # approx reciprocal: EUP slot, ~1e-3 relative deviation from exact division
    probs = e * pl.reciprocal(jnp.sum(e, axis=-1, keepdims=True), approx=True)
    probs = jnp.where(key_valid, probs, 0.0)
    ctx = _bmm('hqk,hkd->hqd', probs, v)                          # (H, T, D_K)
    ctx = jnp.concatenate([ctx[h] for h in range(N_HEAD)], axis=-1)   # (T, D)
    x = x + _mm(ctx, wo_ref[...]) + vrow(R_B_O)

    # ---- convolution module: x = x + Conv(LN(x)) ----
    xn = _layer_norm(x, vrow(R_LN_CONV_G), vrow(R_LN_CONV_B))
    y = _mm(xn, pw1_w_ref[...]) + vrow(R_PW1_B, 2 * D)
    y = y[:, :D] * jax.nn.sigmoid(y[:, D:])                       # GLU over channels, (T, D)

    # depthwise conv along time, fully vreg-resident: shifted windows from static slices
    # + zero blocks (no VMEM scratch round-trip on the vst slot).
    zero = jnp.zeros((PAD, D), jnp.float32)
    acc = jnp.zeros((T, D), jnp.float32) + vrow(R_DW_B)
    for kk in range(K_CONV):
        s = kk - PAD
        if s > 0:
            win = jnp.concatenate([y[s:, :], zero[:s, :]], axis=0)
        elif s < 0:
            win = jnp.concatenate([zero[:(-s), :], y[:T + s, :]], axis=0)
        else:
            win = y
        acc = acc + win * vrow(R_DW_W0 + kk)
    # TODO(synk): padded (masked-out) frames are not zeroed before the depthwise conv —
    # matches this file's reference and plain ConvolutionModule, but ESPnet variants that
    # mask the conv input would differ within the K_CONV receptive field.

    # BatchNorm1d (eval, running stats) + Swish
    yb = (acc - vrow(R_BN_M)) * jax.lax.rsqrt(vrow(R_BN_V) + BN_EPS) * vrow(R_BN_G) \
        + vrow(R_BN_B)
    yb = _swish(yb)
    x = x + _mm(yb, pw2_w_ref[...]) + vrow(R_PW2_B)

    # ---- feed-forward (half-step): x = x + 0.5 * FF(LN(x)) ----
    xn = _layer_norm(x, vrow(R_LN_FF_G), vrow(R_LN_FF_B))
    x = x + FF_SCALE * _ff(xn, ff_w1_ref[...], vrow(R_FF_B1, H_FF),
                           ff_w2_ref[...], vrow(R_FF_B2))

    # ---- final layer norm ----
    x = _layer_norm(x, vrow(R_LN_FIN_G), vrow(R_LN_FIN_B))
    # TODO(synk): at toy D=32 the output store is a 25%-occupied masked vst; at real model
    # sizes D should be a multiple of 128 lanes for an unmasked lane-dense store.
    o_ref[...] = x.reshape(1, T, D).astype(o_ref.dtype)


# ---------------- host-side parameter packing ----------------
def pack_params(p):
    """Pack all small vector params (+ depthwise taps) into one (32, 128) f32 block,
    fuse Q/K/V weights into one (D, 3D) matrix with the softmax scale folded into Wq/bq,
    and cast all big weight matrices to bf16 host-side."""
    inv_sqrt_dk = 1.0 / (D_K ** 0.5)

    def row(a):
        a = jnp.asarray(a, jnp.float32).reshape(1, -1)
        return jnp.pad(a, ((0, 0), (0, VEC_W - a.shape[-1])))

    bqkv = jnp.concatenate([p["bq"] * inv_sqrt_dk, p["bk"], p["bv"]], axis=-1)
    rows = [
        row(p["ln_mac_g"]), row(p["ln_mac_b"]), row(p["mac_b1"]), row(p["mac_b2"]),
        row(p["ln_mha_g"]), row(p["ln_mha_b"]), row(bqkv), row(p["bo"]),
        row(p["ln_conv_g"]), row(p["ln_conv_b"]), row(p["pw1_b"]), row(p["dw_b"]),
        row(p["bn_g"]), row(p["bn_b"]), row(p["bn_m"]), row(p["bn_v"]), row(p["pw2_b"]),
        row(p["ln_ff_g"]), row(p["ln_ff_b"]), row(p["ff_b1"]), row(p["ff_b2"]),
        row(p["ln_fin_g"]), row(p["ln_fin_b"]),
    ]
    rows += [row(p["dw_w"][kk:kk + 1, :]) for kk in range(K_CONV)]
    rows += [jnp.zeros((1, VEC_W), jnp.float32)] * (N_VEC_ROWS - len(rows))
    vec = jnp.concatenate(rows, axis=0)

    wqkv = jnp.concatenate([p["wq"] * inv_sqrt_dk, p["wk"], p["wv"]], axis=-1)
    mats = tuple(m.astype(jnp.bfloat16) for m in
                 (p["mac_w1"], p["mac_w2"], wqkv, p["wo"],
                  p["pw1_w"], p["pw2_w"], p["ff_w1"], p["ff_w2"]))
    return vec, mats


def conformer_encoder_layer(x, mask, params):
    """x: (B, T, D) f32, mask: (B, 1, T) f32 {0,1} prefix mask. Returns ((B, T, D), mask)."""
    vec, mats = pack_params(params)
    # TODO(synk): lengths assume a contiguous prefix mask (standard ESPnet padding masks);
    # a fully general boolean mask would need to be passed as a tensor operand instead.
    lengths = jnp.sum((mask[:, 0, :] > 0).astype(jnp.int32), axis=-1)   # (B,) int32

    grid_spec = pltpu.PrefetchScalarGridSpec(
        num_scalar_prefetch=1,                      # lengths -> SMEM
        grid=(B,),
        in_specs=[pl.BlockSpec((1, T, D), lambda b, lens: (b, 0, 0))]   # streamed per batch
                 + [pl.BlockSpec((N_VEC_ROWS, VEC_W), lambda b, lens: (0, 0))]
                 + [pl.BlockSpec(m.shape, lambda b, lens: (0, 0)) for m in mats],
        out_specs=pl.BlockSpec((1, T, D), lambda b, lens: (b, 0, 0)),
    )
    out = pl.pallas_call(
        encoder_layer_kernel,
        out_shape=jax.ShapeDtypeStruct((B, T, D), jnp.float32),
        grid_spec=grid_spec,
        compiler_params=pltpu.CompilerParams(
            dimension_semantics=("parallel",)),      # batch elements are independent
    )(lengths, x, vec, *mats)
    return out, mask


# ---------------- pure-JAX reference (same math, run by XLA) ----------------
def reference_forward(x, mask, p):
    x = x.astype(jnp.float32)

    # macaron FF (half-step)
    xn = _layer_norm(x, p["ln_mac_g"], p["ln_mac_b"])
    x = x + FF_SCALE * _ff(xn, p["mac_w1"], p["mac_b1"], p["mac_w2"], p["mac_b2"])

    # multi-headed self-attention
    xn = _layer_norm(x, p["ln_mha_g"], p["ln_mha_b"])
    q = (_mm(xn, p["wq"]) + p["bq"]).reshape(B, T, N_HEAD, D_K)
    k = (_mm(xn, p["wk"]) + p["bk"]).reshape(B, T, N_HEAD, D_K)
    v = (_mm(xn, p["wv"]) + p["bv"]).reshape(B, T, N_HEAD, D_K)
    scores = _bmm('bqhd,bkhd->bhqk', q, k) * (1.0 / (D_K ** 0.5))
    key_valid = mask[:, None, :, :] > 0.0                     # (B, 1, 1, T)
    scores = jnp.where(key_valid, scores, NEG_BIG)
    scores = scores - jnp.max(scores, axis=-1, keepdims=True)
    e = jnp.exp(scores)
    probs = e / jnp.sum(e, axis=-1, keepdims=True)
    probs = jnp.where(key_valid, probs, 0.0)
    ctx = _bmm('bhqk,bkhd->bqhd', probs, v).reshape(B, T, D)
    x = x + _mm(ctx, p["wo"]) + p["bo"]

    # convolution module
    xn = _layer_norm(x, p["ln_conv_g"], p["ln_conv_b"])
    y = _mm(xn, p["pw1_w"]) + p["pw1_b"]
    y = y[..., :D] * jax.nn.sigmoid(y[..., D:])
    yp = jnp.pad(y, ((0, 0), (PAD, PAD), (0, 0)))
    acc = p["dw_b"] + sum(yp[:, kk:kk + T, :] * p["dw_w"][kk] for kk in range(K_CONV))
    y = (acc - p["bn_m"]) * jax.lax.rsqrt(p["bn_v"] + BN_EPS) * p["bn_g"] + p["bn_b"]
    y = _swish(y)
    x = x + _mm(y, p["pw2_w"]) + p["pw2_b"]

    # FF (half-step)
    xn = _layer_norm(x, p["ln_ff_g"], p["ln_ff_b"])
    x = x + FF_SCALE * _ff(xn, p["ff_w1"], p["ff_b1"], p["ff_w2"], p["ff_b2"])

    return _layer_norm(x, p["ln_fin_g"], p["ln_fin_b"])


# ---------------- deterministic parameter init ----------------
def init_params(key):
    params = {}
    for name, shape in PARAM_SHAPES:
        key, sub = jax.random.split(key)
        if name.startswith("ln_") and name.endswith("_g"):
            params[name] = jnp.ones(shape, jnp.float32) + 0.1 * jax.random.normal(sub, shape)
        elif name.startswith("ln_") and name.endswith("_b"):
            params[name] = 0.1 * jax.random.normal(sub, shape).astype(jnp.float32)
        elif name == "bn_g":
            params[name] = jnp.ones(shape, jnp.float32) + 0.1 * jax.random.normal(sub, shape)
        elif name in ("bn_b", "bn_m"):
            params[name] = 0.1 * jax.random.normal(sub, shape).astype(jnp.float32)
        elif name == "bn_v":
            params[name] = 1.0 + 0.1 * jnp.abs(jax.random.normal(sub, shape)).astype(jnp.float32)
        elif len(shape) == 2 and shape[0] == 1:       # biases
            params[name] = 0.02 * jax.random.normal(sub, shape).astype(jnp.float32)
        else:                                         # weight matrices (and dw taps)
            fan_in = shape[0]
            params[name] = (jax.random.normal(sub, shape)
                            / jnp.sqrt(jnp.float32(fan_in))).astype(jnp.float32)
    return params


# ---------------- main ----------------
if __name__ == "__main__":
    key = jax.random.PRNGKey(0)
    kx, kp = jax.random.split(key)
    x = jax.random.normal(kx, (B, T, D), dtype=jnp.float32)

    # mask (B, 1, T): batch 0 fully valid, batch 1 has the last 2 frames padded out.
    lengths = jnp.array([T, T - 2], dtype=jnp.int32)
    t_idx = jnp.arange(T)[None, None, :]
    mask = (t_idx < lengths[:, None, None]).astype(jnp.float32)

    params = init_params(kp)

    out, out_mask = conformer_encoder_layer(x, mask, params)
    out = jax.block_until_ready(out)

    ref = jax.block_until_ready(reference_forward(x, mask, params))

    if not jnp.allclose(out, ref, atol=2e-2, rtol=2e-2):
        err = float(jnp.max(jnp.abs(out - ref)))
        raise AssertionError(f"Pallas kernel output mismatch vs JAX reference (max abs err {err})")

    # TODO(synk): dropout and stochastic-depth layer skipping are training-time RNG
    # behaviors; this kernel implements the eval-mode (deterministic) forward pass.
    print("KERNEL_OK")
</pallas_src>

<mosaic_0001>
module attributes {stable_mosaic.version = 11 : i64} {
  func.func @encoder_layer_kernel(%arg0: i32, %arg1: memref<2xi32, #tpu.memory_space<smem>>, %arg2: memref<1x8x32xf32, #tpu.memory_space<vmem>>, %arg3: memref<32x128xf32, #tpu.memory_space<vmem>>, %arg4: memref<32x64xbf16, #tpu.memory_space<vmem>>, %arg5: memref<64x32xbf16, #tpu.memory_space<vmem>>, %arg6: memref<32x96xbf16, #tpu.memory_space<vmem>>, %arg7: memref<32x32xbf16, #tpu.memory_space<vmem>>, %arg8: memref<32x64xbf16, #tpu.memory_space<vmem>>, %arg9: memref<32x32xbf16, #tpu.memory_space<vmem>>, %arg10: memref<32x64xbf16, #tpu.memory_space<vmem>>, %arg11: memref<64x32xbf16, #tpu.memory_space<vmem>>, %arg12: memref<1x8x32xf32, #tpu.memory_space<vmem>>) attributes {dimension_semantics = [#tpu.dimension_semantics<parallel>], iteration_bounds = array<i64: 2>, scalar_prefetch = 1 : i64, scratch_operands = 0 : i64, tpu.core_type = #tpu.core_type<tc>, window_params = [{transform_indices = @transform_0, window_bounds = array<i64: 1, 8, 32>}, {pipeline_mode = #tpu.pipeline_mode<synchronous>, transform_indices = @transform_1, window_bounds = array<i64: 32, 128>}, {pipeline_mode = #tpu.pipeline_mode<synchronous>, transform_indices = @transform_2, window_bounds = array<i64: 32, 64>}, {pipeline_mode = #tpu.pipeline_mode<synchronous>, transform_indices = @transform_3, window_bounds = array<i64: 64, 32>}, {pipeline_mode = #tpu.pipeline_mode<synchronous>, transform_indices = @transform_4, window_bounds = array<i64: 32, 96>}, {pipeline_mode = #tpu.pipeline_mode<synchronous>, transform_indices = @transform_5, window_bounds = array<i64: 32, 32>}, {pipeline_mode = #tpu.pipeline_mode<synchronous>, transform_indices = @transform_6, window_bounds = array<i64: 32, 64>}, {pipeline_mode = #tpu.pipeline_mode<synchronous>, transform_indices = @transform_7, window_bounds = array<i64: 32, 32>}, {pipeline_mode = #tpu.pipeline_mode<synchronous>, transform_indices = @transform_8, window_bounds = array<i64: 32, 64>}, {pipeline_mode = #tpu.pipeline_mode<synchronous>, transform_indices = @transform_9, window_bounds = array<i64: 64, 32>}, {transform_indices = @transform_10, window_bounds = array<i64: 1, 8, 32>}]} {
    %c0 = arith.constant 0 : index
    %c0_0 = arith.constant 0 : index
    %0 = vector.load %arg3[%c0, %c0_0] : memref<32x128xf32, #tpu.memory_space<vmem>>, vector<32x128xf32>
    %c0_1 = arith.constant 0 : index
    %c0_2 = arith.constant 0 : index
    %c0_3 = arith.constant 0 : index
    %1 = vector.load %arg2[%c0_1, %c0_2, %c0_3] : memref<1x8x32xf32, #tpu.memory_space<vmem>>, vector<1x8x32xf32>
    %2 = vector.shape_cast %1 : vector<1x8x32xf32> to vector<8x32xf32>
    %3 = vector.extract_strided_slice %0 {offsets = [0, 0], sizes = [1, 32], strides = [1, 1]} : vector<32x128xf32> to vector<1x32xf32>
    %4 = vector.extract_strided_slice %0 {offsets = [1, 0], sizes = [1, 32], strides = [1, 1]} : vector<32x128xf32> to vector<1x32xf32>
    %cst = arith.constant dense<0.000000e+00> : vector<8xf32>
    %5 = vector.multi_reduction <add>, %2, %cst [1] : vector<8x32xf32> to vector<8xf32>
    %6 = vector.shape_cast %5 : vector<8xf32> to vector<8x1xf32>
    %cst_4 = arith.constant 3.200000e+01 : f32
    %7 = vector.broadcast %cst_4 : f32 to vector<8x1xf32>
    %8 = arith.divf %6, %7 : vector<8x1xf32>
    %9 = vector.broadcast %8 : vector<8x1xf32> to vector<8x32xf32>
    %10 = arith.subf %2, %9 : vector<8x32xf32>
    %11 = arith.mulf %10, %10 : vector<8x32xf32>
    %cst_5 = arith.constant dense<0.000000e+00> : vector<8xf32>
    %12 = vector.multi_reduction <add>, %11, %cst_5 [1] : vector<8x32xf32> to vector<8xf32>
    %13 = vector.shape_cast %12 : vector<8xf32> to vector<8x1xf32>
    %cst_6 = arith.constant 3.200000e+01 : f32
    %14 = vector.broadcast %cst_6 : f32 to vector<8x1xf32>
    %15 = arith.divf %13, %14 : vector<8x1xf32>
    %16 = vector.broadcast %8 : vector<8x1xf32> to vector<8x32xf32>
    %17 = arith.subf %2, %16 : vector<8x32xf32>
    %cst_7 = arith.constant 9.99999996E-13 : f32
    %18 = vector.broadcast %cst_7 : f32 to vector<8x1xf32>
    %19 = arith.addf %15, %18 : vector<8x1xf32>
    %20 = math.rsqrt %19 : vector<8x1xf32>
    %21 = vector.broadcast %20 : vector<8x1xf32> to vector<8x32xf32>
    %22 = arith.mulf %17, %21 : vector<8x32xf32>
    %23 = vector.broadcast %3 : vector<1x32xf32> to vector<8x32xf32>
    %24 = arith.mulf %22, %23 : vector<8x32xf32>
    %25 = vector.broadcast %4 : vector<1x32xf32> to vector<8x32xf32>
    %26 = arith.addf %24, %25 : vector<8x32xf32>
    %c0_8 = arith.constant 0 : index
    %c0_9 = arith.constant 0 : index
    %27 = vector.load %arg4[%c0_8, %c0_9] : memref<32x64xbf16, #tpu.memory_space<vmem>>, vector<32x64xbf16>
    %28 = vector.extract_strided_slice %0 {offsets = [2, 0], sizes = [1, 64], strides = [1, 1]} : vector<32x128xf32> to vector<1x64xf32>
    %c0_10 = arith.constant 0 : index
    %c0_11 = arith.constant 0 : index
    %29 = vector.load %arg5[%c0_10, %c0_11] : memref<64x32xbf16, #tpu.memory_space<vmem>>, vector<64x32xbf16>
    %30 = vector.extract_strided_slice %0 {offsets = [3, 0], sizes = [1, 32], strides = [1, 1]} : vector<32x128xf32> to vector<1x32xf32>
    %31 = arith.truncf %26 : vector<8x32xf32> to vector<8x32xbf16>
    %cst_12 = arith.constant dense<0.000000e+00> : vector<8x64xf32>
    %32 = tpu.matmul %31, %27, %cst_12 {dimension_numbers = #tpu.dot_dimension_numbers<[1], [0], [0], [1], [0, 0, 1, 1], [], []>} : vector<8x32xbf16>, vector<32x64xbf16>, vector<8x64xf32> -> vector<8x64xf32>
    %33 = vector.broadcast %28 : vector<1x64xf32> to vector<8x64xf32>
    %34 = arith.addf %32, %33 : vector<8x64xf32>
    %35 = arith.negf %34 : vector<8x64xf32>
    %36 = math.exp %35 : vector<8x64xf32>
    %cst_13 = arith.constant 1.000000e+00 : f32
    %37 = vector.broadcast %cst_13 : f32 to vector<8x64xf32>
    %38 = arith.addf %37, %36 : vector<8x64xf32>
    %39 = arith.divf %37, %38 : vector<8x64xf32>
    %40 = arith.mulf %34, %39 : vector<8x64xf32>
    %41 = arith.truncf %40 : vector<8x64xf32> to vector<8x64xbf16>
    %cst_14 = arith.constant dense<0.000000e+00> : vector<8x32xf32>
    %42 = tpu.matmul %41, %29, %cst_14 {dimension_numbers = #tpu.dot_dimension_numbers<[1], [0], [0], [1], [0, 0, 1, 1], [], []>} : vector<8x64xbf16>, vector<64x32xbf16>, vector<8x32xf32> -> vector<8x32xf32>
    %43 = vector.broadcast %30 : vector<1x32xf32> to vector<8x32xf32>
    %44 = arith.addf %42, %43 : vector<8x32xf32>
    %cst_15 = arith.constant 5.000000e-01 : f32
    %45 = vector.broadcast %cst_15 : f32 to vector<8x32xf32>
    %46 = arith.mulf %45, %44 : vector<8x32xf32>
    %47 = arith.addf %2, %46 : vector<8x32xf32>
    %48 = vector.extract_strided_slice %0 {offsets = [4, 0], sizes = [1, 32], strides = [1, 1]} : vector<32x128xf32> to vector<1x32xf32>
    %49 = vector.extract_strided_slice %0 {offsets = [5, 0], sizes = [1, 32], strides = [1, 1]} : vector<32x128xf32> to vector<1x32xf32>
    %cst_16 = arith.constant dense<0.000000e+00> : vector<8xf32>
    %50 = vector.multi_reduction <add>, %47, %cst_16 [1] : vector<8x32xf32> to vector<8xf32>
    %51 = vector.shape_cast %50 : vector<8xf32> to vector<8x1xf32>
    %cst_17 = arith.constant 3.200000e+01 : f32
    %52 = vector.broadcast %cst_17 : f32 to vector<8x1xf32>
    %53 = arith.divf %51, %52 : vector<8x1xf32>
    %54 = vector.broadcast %53 : vector<8x1xf32> to vector<8x32xf32>
    %55 = arith.subf %47, %54 : vector<8x32xf32>
    %56 = arith.mulf %55, %55 : vector<8x32xf32>
    %cst_18 = arith.constant dense<0.000000e+00> : vector<8xf32>
    %57 = vector.multi_reduction <add>, %56, %cst_18 [1] : vector<8x32xf32> to vector<8xf32>
    %58 = vector.shape_cast %57 : vector<8xf32> to vector<8x1xf32>
    %cst_19 = arith.constant 3.200000e+01 : f32
    %59 = vector.broadcast %cst_19 : f32 to vector<8x1xf32>
    %60 = arith.divf %58, %59 : vector<8x1xf32>
    %61 = vector.broadcast %53 : vector<8x1xf32> to vector<8x32xf32>
    %62 = arith.subf %47, %61 : vector<8x32xf32>
    %cst_20 = arith.constant 9.99999996E-13 : f32
    %63 = vector.broadcast %cst_20 : f32 to vector<8x1xf32>
    %64 = arith.addf %60, %63 : vector<8x1xf32>
    %65 = math.rsqrt %64 : vector<8x1xf32>
    %66 = vector.broadcast %65 : vector<8x1xf32> to vector<8x32xf32>
    %67 = arith.mulf %62, %66 : vector<8x32xf32>
    %68 = vector.broadcast %48 : vector<1x32xf32> to vector<8x32xf32>
    %69 = arith.mulf %67, %68 : vector<8x32xf32>
    %70 = vector.broadcast %49 : vector<1x32xf32> to vector<8x32xf32>
    %71 = arith.addf %69, %70 : vector<8x32xf32>
    %c0_21 = arith.constant 0 : index
    %c0_22 = arith.constant 0 : index
    %72 = vector.load %arg6[%c0_21, %c0_22] : memref<32x96xbf16, #tpu.memory_space<vmem>>, vector<32x96xbf16>
    %73 = arith.truncf %71 : vector<8x32xf32> to vector<8x32xbf16>
    %cst_23 = arith.constant dense<0.000000e+00> : vector<8x96xf32>
    %74 = tpu.matmul %73, %72, %cst_23 {dimension_numbers = #tpu.dot_dimension_numbers<[1], [0], [0], [1], [0, 0, 1, 1], [], []>} : vector<8x32xbf16>, vector<32x96xbf16>, vector<8x96xf32> -> vector<8x96xf32>
    %75 = vector.extract_strided_slice %0 {offsets = [6, 0], sizes = [1, 96], strides = [1, 1]} : vector<32x128xf32> to vector<1x96xf32>
    %76 = vector.broadcast %75 : vector<1x96xf32> to vector<8x96xf32>
    %77 = arith.addf %74, %76 : vector<8x96xf32>
    %78 = vector.extract_strided_slice %77 {offsets = [0, 0], sizes = [8, 32], strides = [1, 1]} : vector<8x96xf32> to vector<8x32xf32>
    %79 = vector.shape_cast %78 : vector<8x32xf32> to vector<1x8x32xf32>
    %80 = vector.extract_strided_slice %79 {offsets = [0, 0, 0], sizes = [1, 8, 8], strides = [1, 1, 1]} : vector<1x8x32xf32> to vector<1x8x8xf32>
    %81 = vector.extract_strided_slice %79 {offsets = [0, 0, 8], sizes = [1, 8, 8], strides = [1, 1, 1]} : vector<1x8x32xf32> to vector<1x8x8xf32>
    %82 = vector.extract_strided_slice %79 {offsets = [0, 0, 16], sizes = [1, 8, 8], strides = [1, 1, 1]} : vector<1x8x32xf32> to vector<1x8x8xf32>
    %83 = vector.extract_strided_slice %79 {offsets = [0, 0, 24], sizes = [1, 8, 8], strides = [1, 1, 1]} : vector<1x8x32xf32> to vector<1x8x8xf32>
    %84 = tpu.concatenate %80, %81, %82, %83 in 0 : vector<1x8x8xf32>, vector<1x8x8xf32>, vector<1x8x8xf32>, vector<1x8x8xf32> -> vector<4x8x8xf32>
    %85 = vector.extract_strided_slice %77 {offsets = [0, 32], sizes = [8, 32], strides = [1, 1]} : vector<8x96xf32> to vector<8x32xf32>
    %86 = vector.shape_cast %85 : vector<8x32xf32> to vector<1x8x32xf32>
    %87 = vector.extract_strided_slice %86 {offsets = [0, 0, 0], sizes = [1, 8, 8], strides = [1, 1, 1]} : vector<1x8x32xf32> to vector<1x8x8xf32>
    %88 = vector.extract_strided_slice %86 {offsets = [0, 0, 8], sizes = [1, 8, 8], strides = [1, 1, 1]} : vector<1x8x32xf32> to vector<1x8x8xf32>
    %89 = vector.extract_strided_slice %86 {offsets = [0, 0, 16], sizes = [1, 8, 8], strides = [1, 1, 1]} : vector<1x8x32xf32> to vector<1x8x8xf32>
    %90 = vector.extract_strided_slice %86 {offsets = [0, 0, 24], sizes = [1, 8, 8], strides = [1, 1, 1]} : vector<1x8x32xf32> to vector<1x8x8xf32>
    %91 = tpu.concatenate %87, %88, %89, %90 in 0 : vector<1x8x8xf32>, vector<1x8x8xf32>, vector<1x8x8xf32>, vector<1x8x8xf32> -> vector<4x8x8xf32>
    %92 = vector.extract_strided_slice %77 {offsets = [0, 64], sizes = [8, 32], strides = [1, 1]} : vector<8x96xf32> to vector<8x32xf32>
    %93 = vector.shape_cast %92 : vector<8x32xf32> to vector<1x8x32xf32>
    %94 = vector.extract_strided_slice %93 {offsets = [0, 0, 0], sizes = [1, 8, 8], strides = [1, 1, 1]} : vector<1x8x32xf32> to vector<1x8x8xf32>
    %95 = vector.extract_strided_slice %93 {offsets = [0, 0, 8], sizes = [1, 8, 8], strides = [1, 1, 1]} : vector<1x8x32xf32> to vector<1x8x8xf32>
    %96 = vector.extract_strided_slice %93 {offsets = [0, 0, 16], sizes = [1, 8, 8], strides = [1, 1, 1]} : vector<1x8x32xf32> to vector<1x8x8xf32>
    %97 = vector.extract_strided_slice %93 {offsets = [0, 0, 24], sizes = [1, 8, 8], strides = [1, 1, 1]} : vector<1x8x32xf32> to vector<1x8x8xf32>
    %98 = tpu.concatenate %94, %95, %96, %97 in 0 : vector<1x8x8xf32>, vector<1x8x8xf32>, vector<1x8x8xf32>, vector<1x8x8xf32> -> vector<4x8x8xf32>
    %99 = tpu.iota {dimensions = array<i32: 2>} : vector<1x1x8xi32>
    %100 = arith.index_cast %arg0 : i32 to index
    %101 = memref.load %arg1[%100] : memref<2xi32, #tpu.memory_space<smem>>
    %102 = vector.broadcast %101 : i32 to vector<1x1x8xi32>
    %103 = arith.cmpi slt, %99, %102 : vector<1x1x8xi32>
    %104 = arith.truncf %84 : vector<4x8x8xf32> to vector<4x8x8xbf16>
    %105 = arith.truncf %91 : vector<4x8x8xf32> to vector<4x8x8xbf16>
    "tpu.trace_start"() <{level = 10 : i32, message = "hqd,hkd->hqk"}> : () -> ()
    %cst_24 = arith.constant dense<0.000000e+00> : vector<4x8x8xf32>
    %106 = tpu.matmul %104, %105, %cst_24 {dimension_numbers = #tpu.dot_dimension_numbers<[2], [2], [1], [1], [0, 0, 0, 1, 1, 1], [0], [0]>} : vector<4x8x8xbf16>, vector<4x8x8xbf16>, vector<4x8x8xf32> -> vector<4x8x8xf32>
    %cst_25 = arith.constant -1.000000e+09 : f32
    "tpu.trace_stop"() : () -> ()
    %107 = vector.shape_cast %103 : vector<1x1x8xi1> to vector<1x1x8xi1>
    %108 = vector.broadcast %107 : vector<1x1x8xi1> to vector<4x8x8xi1>
    %109 = vector.broadcast %cst_25 : f32 to vector<4x8x8xf32>
    %110 = arith.select %108, %106, %109 : vector<4x8x8xi1>, vector<4x8x8xf32>
    %cst_26 = arith.constant dense<0xFF800000> : vector<4x8xf32>
    %111 = vector.multi_reduction <maximumf>, %110, %cst_26 [2] : vector<4x8x8xf32> to vector<4x8xf32>
    %112 = vector.shape_cast %111 : vector<4x8xf32> to vector<4x8x1xf32>
    %113 = vector.broadcast %112 : vector<4x8x1xf32> to vector<4x8x8xf32>
    %114 = arith.subf %110, %113 : vector<4x8x8xf32>
    %115 = math.exp %114 : vector<4x8x8xf32>
    %cst_27 = arith.constant dense<0.000000e+00> : vector<4x8xf32>
    %116 = vector.multi_reduction <add>, %115, %cst_27 [2] : vector<4x8x8xf32> to vector<4x8xf32>
    %117 = vector.shape_cast %116 : vector<4x8xf32> to vector<4x8x1xf32>
    %118 = tpu.reciprocal %117 {approx = true} : vector<4x8x1xf32> -> vector<4x8x1xf32>
    %119 = vector.broadcast %118 : vector<4x8x1xf32> to vector<4x8x8xf32>
    %120 = arith.mulf %115, %119 : vector<4x8x8xf32>
    %cst_28 = arith.constant 0.000000e+00 : f32
    %121 = vector.shape_cast %103 : vector<1x1x8xi1> to vector<1x1x8xi1>
    %122 = vector.broadcast %121 : vector<1x1x8xi1> to vector<4x8x8xi1>
    %123 = vector.broadcast %cst_28 : f32 to vector<4x8x8xf32>
    %124 = arith.select %122, %120, %123 : vector<4x8x8xi1>, vector<4x8x8xf32>
    %125 = arith.truncf %124 : vector<4x8x8xf32> to vector<4x8x8xbf16>
    %126 = arith.truncf %98 : vector<4x8x8xf32> to vector<4x8x8xbf16>
    "tpu.trace_start"() <{level = 10 : i32, message = "hqk,hkd->hqd"}> : () -> ()
    %cst_29 = arith.constant dense<0.000000e+00> : vector<4x8x8xf32>
    %127 = tpu.matmul %125, %126, %cst_29 {dimension_numbers = #tpu.dot_dimension_numbers<[2], [1], [1], [2], [0, 0, 0, 1, 1, 2], [0], [0]>} : vector<4x8x8xbf16>, vector<4x8x8xbf16>, vector<4x8x8xf32> -> vector<4x8x8xf32>
    "tpu.trace_stop"() : () -> ()
    %128 = vector.extract_strided_slice %127 {offsets = [0, 0, 0], sizes = [1, 8, 8], strides = [1, 1, 1]} : vector<4x8x8xf32> to vector<1x8x8xf32>
    %129 = vector.shape_cast %128 : vector<1x8x8xf32> to vector<8x8xf32>
    %130 = vector.extract_strided_slice %127 {offsets = [1, 0, 0], sizes = [1, 8, 8], strides = [1, 1, 1]} : vector<4x8x8xf32> to vector<1x8x8xf32>
    %131 = vector.shape_cast %130 : vector<1x8x8xf32> to vector<8x8xf32>
    %132 = vector.extract_strided_slice %127 {offsets = [2, 0, 0], sizes = [1, 8, 8], strides = [1, 1, 1]} : vector<4x8x8xf32> to vector<1x8x8xf32>
    %133 = vector.shape_cast %132 : vector<1x8x8xf32> to vector<8x8xf32>
    %134 = vector.extract_strided_slice %127 {offsets = [3, 0, 0], sizes = [1, 8, 8], strides = [1, 1, 1]} : vector<4x8x8xf32> to vector<1x8x8xf32>
    %135 = vector.shape_cast %134 : vector<1x8x8xf32> to vector<8x8xf32>
    %136 = tpu.concatenate %129, %131, %133, %135 in 1 : vector<8x8xf32>, vector<8x8xf32>, vector<8x8xf32>, vector<8x8xf32> -> vector<8x32xf32>
    %c0_30 = arith.constant 0 : index
    %c0_31 = arith.constant 0 : index
    %137 = vector.load %arg7[%c0_30, %c0_31] : memref<32x32xbf16, #tpu.memory_space<vmem>>, vector<32x32xbf16>
    %138 = arith.truncf %136 : vector<8x32xf32> to vector<8x32xbf16>
    %cst_32 = arith.constant dense<0.000000e+00> : vector<8x32xf32>
    %139 = tpu.matmul %138, %137, %cst_32 {dimension_numbers = #tpu.dot_dimension_numbers<[1], [0], [0], [1], [0, 0, 1, 1], [], []>} : vector<8x32xbf16>, vector<32x32xbf16>, vector<8x32xf32> -> vector<8x32xf32>
    %140 = arith.addf %47, %139 : vector<8x32xf32>
    %141 = vector.extract_strided_slice %0 {offsets = [7, 0], sizes = [1, 32], strides = [1, 1]} : vector<32x128xf32> to vector<1x32xf32>
    %142 = vector.broadcast %141 : vector<1x32xf32> to vector<8x32xf32>
    %143 = arith.addf %140, %142 : vector<8x32xf32>
    %144 = vector.extract_strided_slice %0 {offsets = [8, 0], sizes = [1, 32], strides = [1, 1]} : vector<32x128xf32> to vector<1x32xf32>
    %145 = vector.extract_strided_slice %0 {offsets = [9, 0], sizes = [1, 32], strides = [1, 1]} : vector<32x128xf32> to vector<1x32xf32>
    %cst_33 = arith.constant dense<0.000000e+00> : vector<8xf32>
    %146 = vector.multi_reduction <add>, %143, %cst_33 [1] : vector<8x32xf32> to vector<8xf32>
    %147 = vector.shape_cast %146 : vector<8xf32> to vector<8x1xf32>
    %cst_34 = arith.constant 3.200000e+01 : f32
    %148 = vector.broadcast %cst_34 : f32 to vector<8x1xf32>
    %149 = arith.divf %147, %148 : vector<8x1xf32>
    %150 = vector.broadcast %149 : vector<8x1xf32> to vector<8x32xf32>
    %151 = arith.subf %143, %150 : vector<8x32xf32>
    %152 = arith.mulf %151, %151 : vector<8x32xf32>
    %cst_35 = arith.constant dense<0.000000e+00> : vector<8xf32>
    %153 = vector.multi_reduction <add>, %152, %cst_35 [1] : vector<8x32xf32> to vector<8xf32>
    %154 = vector.shape_cast %153 : vector<8xf32> to vector<8x1xf32>
    %cst_36 = arith.constant 3.200000e+01 : f32
    %155 = vector.broadcast %cst_36 : f32 to vector<8x1xf32>
    %156 = arith.divf %154, %155 : vector<8x1xf32>
    %157 = vector.broadcast %149 : vector<8x1xf32> to vector<8x32xf32>
    %158 = arith.subf %143, %157 : vector<8x32xf32>
    %cst_37 = arith.constant 9.99999996E-13 : f32
    %159 = vector.broadcast %cst_37 : f32 to vector<8x1xf32>
    %160 = arith.addf %156, %159 : vector<8x1xf32>
    %161 = math.rsqrt %160 : vector<8x1xf32>
    %162 = vector.broadcast %161 : vector<8x1xf32> to vector<8x32xf32>
    %163 = arith.mulf %158, %162 : vector<8x32xf32>
    %164 = vector.broadcast %144 : vector<1x32xf32> to vector<8x32xf32>
    %165 = arith.mulf %163, %164 : vector<8x32xf32>
    %166 = vector.broadcast %145 : vector<1x32xf32> to vector<8x32xf32>
    %167 = arith.addf %165, %166 : vector<8x32xf32>
    %c0_38 = arith.constant 0 : index
    %c0_39 = arith.constant 0 : index
    %168 = vector.load %arg8[%c0_38, %c0_39] : memref<32x64xbf16, #tpu.memory_space<vmem>>, vector<32x64xbf16>
    %169 = arith.truncf %167 : vector<8x32xf32> to vector<8x32xbf16>
    %cst_40 = arith.constant dense<0.000000e+00> : vector<8x64xf32>
    %170 = tpu.matmul %169, %168, %cst_40 {dimension_numbers = #tpu.dot_dimension_numbers<[1], [0], [0], [1], [0, 0, 1, 1], [], []>} : vector<8x32xbf16>, vector<32x64xbf16>, vector<8x64xf32> -> vector<8x64xf32>
    %171 = vector.extract_strided_slice %0 {offsets = [10, 0], sizes = [1, 64], strides = [1, 1]} : vector<32x128xf32> to vector<1x64xf32>
    %172 = vector.broadcast %171 : vector<1x64xf32> to vector<8x64xf32>
    %173 = arith.addf %170, %172 : vector<8x64xf32>
    %174 = vector.extract_strided_slice %173 {offsets = [0, 0], sizes = [8, 32], strides = [1, 1]} : vector<8x64xf32> to vector<8x32xf32>
    %175 = vector.extract_strided_slice %173 {offsets = [0, 32], sizes = [8, 32], strides = [1, 1]} : vector<8x64xf32> to vector<8x32xf32>
    %176 = arith.negf %175 : vector<8x32xf32>
    %177 = math.exp %176 : vector<8x32xf32>
    %cst_41 = arith.constant 1.000000e+00 : f32
    %178 = vector.broadcast %cst_41 : f32 to vector<8x32xf32>
    %179 = arith.addf %178, %177 : vector<8x32xf32>
    %180 = arith.divf %178, %179 : vector<8x32xf32>
    %181 = arith.mulf %174, %180 : vector<8x32xf32>
    %cst_42 = arith.constant 0.000000e+00 : f32
    %182 = vector.broadcast %cst_42 : f32 to vector<3x32xf32>
    %cst_43 = arith.constant 0.000000e+00 : f32
    %183 = vector.broadcast %cst_43 : f32 to vector<8x32xf32>
    %184 = vector.extract_strided_slice %0 {offsets = [11, 0], sizes = [1, 32], strides = [1, 1]} : vector<32x128xf32> to vector<1x32xf32>
    %185 = vector.broadcast %184 : vector<1x32xf32> to vector<8x32xf32>
    %186 = arith.addf %183, %185 : vector<8x32xf32>
    %187 = vector.extract_strided_slice %181 {offsets = [0, 0], sizes = [5, 32], strides = [1, 1]} : vector<8x32xf32> to vector<5x32xf32>
    %188 = tpu.concatenate %182, %187 in 0 : vector<3x32xf32>, vector<5x32xf32> -> vector<8x32xf32>
    %189 = vector.extract_strided_slice %0 {offsets = [23, 0], sizes = [1, 32], strides = [1, 1]} : vector<32x128xf32> to vector<1x32xf32>
    %190 = vector.broadcast %189 : vector<1x32xf32> to vector<8x32xf32>
    %191 = arith.mulf %188, %190 : vector<8x32xf32>
    %192 = arith.addf %186, %191 : vector<8x32xf32>
    %193 = vector.extract_strided_slice %182 {offsets = [0, 0], sizes = [2, 32], strides = [1, 1]} : vector<3x32xf32> to vector<2x32xf32>
    %194 = vector.extract_strided_slice %181 {offsets = [0, 0], sizes = [6, 32], strides = [1, 1]} : vector<8x32xf32> to vector<6x32xf32>
    %195 = tpu.concatenate %193, %194 in 0 : vector<2x32xf32>, vector<6x32xf32> -> vector<8x32xf32>
    %196 = vector.extract_strided_slice %0 {offsets = [24, 0], sizes = [1, 32], strides = [1, 1]} : vector<32x128xf32> to vector<1x32xf32>
    %197 = vector.broadcast %196 : vector<1x32xf32> to vector<8x32xf32>
    %198 = arith.mulf %195, %197 : vector<8x32xf32>
    %199 = arith.addf %192, %198 : vector<8x32xf32>
    %200 = vector.extract_strided_slice %182 {offsets = [0, 0], sizes = [1, 32], strides = [1, 1]} : vector<3x32xf32> to vector<1x32xf32>
    %201 = vector.extract_strided_slice %181 {offsets = [0, 0], sizes = [7, 32], strides = [1, 1]} : vector<8x32xf32> to vector<7x32xf32>
    %202 = tpu.concatenate %200, %201 in 0 : vector<1x32xf32>, vector<7x32xf32> -> vector<8x32xf32>
    %203 = vector.extract_strided_slice %0 {offsets = [25, 0], sizes = [1, 32], strides = [1, 1]} : vector<32x128xf32> to vector<1x32xf32>
    %204 = vector.broadcast %203 : vector<1x32xf32> to vector<8x32xf32>
    %205 = arith.mulf %202, %204 : vector<8x32xf32>
    %206 = arith.addf %199, %205 : vector<8x32xf32>
    %207 = vector.extract_strided_slice %0 {offsets = [26, 0], sizes = [1, 32], strides = [1, 1]} : vector<32x128xf32> to vector<1x32xf32>
    %208 = vector.broadcast %207 : vector<1x32xf32> to vector<8x32xf32>
    %209 = arith.mulf %181, %208 : vector<8x32xf32>
    %210 = arith.addf %206, %209 : vector<8x32xf32>
    %211 = vector.extract_strided_slice %181 {offsets = [1, 0], sizes = [7, 32], strides = [1, 1]} : vector<8x32xf32> to vector<7x32xf32>
    %212 = vector.extract_strided_slice %182 {offsets = [0, 0], sizes = [1, 32], strides = [1, 1]} : vector<3x32xf32> to vector<1x32xf32>
    %213 = tpu.concatenate %211, %212 in 0 : vector<7x32xf32>, vector<1x32xf32> -> vector<8x32xf32>
    %214 = vector.extract_strided_slice %0 {offsets = [27, 0], sizes = [1, 32], strides = [1, 1]} : vector<32x128xf32> to vector<1x32xf32>
    %215 = vector.broadcast %214 : vector<1x32xf32> to vector<8x32xf32>
    %216 = arith.mulf %213, %215 : vector<8x32xf32>
    %217 = arith.addf %210, %216 : vector<8x32xf32>
    %218 = vector.extract_strided_slice %181 {offsets = [2, 0], sizes = [6, 32], strides = [1, 1]} : vector<8x32xf32> to vector<6x32xf32>
    %219 = vector.extract_strided_slice %182 {offsets = [0, 0], sizes = [2, 32], strides = [1, 1]} : vector<3x32xf32> to vector<2x32xf32>
    %220 = tpu.concatenate %218, %219 in 0 : vector<6x32xf32>, vector<2x32xf32> -> vector<8x32xf32>
    %221 = vector.extract_strided_slice %0 {offsets = [28, 0], sizes = [1, 32], strides = [1, 1]} : vector<32x128xf32> to vector<1x32xf32>
    %222 = vector.broadcast %221 : vector<1x32xf32> to vector<8x32xf32>
    %223 = arith.mulf %220, %222 : vector<8x32xf32>
    %224 = arith.addf %217, %223 : vector<8x32xf32>
    %225 = vector.extract_strided_slice %181 {offsets = [3, 0], sizes = [5, 32], strides = [1, 1]} : vector<8x32xf32> to vector<5x32xf32>
    %226 = tpu.concatenate %225, %182 in 0 : vector<5x32xf32>, vector<3x32xf32> -> vector<8x32xf32>
    %227 = vector.extract_strided_slice %0 {offsets = [29, 0], sizes = [1, 32], strides = [1, 1]} : vector<32x128xf32> to vector<1x32xf32>
    %228 = vector.broadcast %227 : vector<1x32xf32> to vector<8x32xf32>
    %229 = arith.mulf %226, %228 : vector<8x32xf32>
    %230 = arith.addf %224, %229 : vector<8x32xf32>
    %231 = vector.extract_strided_slice %0 {offsets = [14, 0], sizes = [1, 32], strides = [1, 1]} : vector<32x128xf32> to vector<1x32xf32>
    %232 = vector.broadcast %231 : vector<1x32xf32> to vector<8x32xf32>
    %233 = arith.subf %230, %232 : vector<8x32xf32>
    %234 = vector.extract_strided_slice %0 {offsets = [15, 0], sizes = [1, 32], strides = [1, 1]} : vector<32x128xf32> to vector<1x32xf32>
    %cst_44 = arith.constant 9.99999974E-6 : f32
    %235 = vector.broadcast %cst_44 : f32 to vector<1x32xf32>
    %236 = arith.addf %234, %235 : vector<1x32xf32>
    %237 = math.rsqrt %236 : vector<1x32xf32>
    %238 = vector.broadcast %237 : vector<1x32xf32> to vector<8x32xf32>
    %239 = arith.mulf %233, %238 : vector<8x32xf32>
    %240 = vector.extract_strided_slice %0 {offsets = [12, 0], sizes = [1, 32], strides = [1, 1]} : vector<32x128xf32> to vector<1x32xf32>
    %241 = vector.broadcast %240 : vector<1x32xf32> to vector<8x32xf32>
    %242 = arith.mulf %239, %241 : vector<8x32xf32>
    %243 = vector.extract_strided_slice %0 {offsets = [13, 0], sizes = [1, 32], strides = [1, 1]} : vector<32x128xf32> to vector<1x32xf32>
    %244 = vector.broadcast %243 : vector<1x32xf32> to vector<8x32xf32>
    %245 = arith.addf %242, %244 : vector<8x32xf32>
    %246 = arith.negf %245 : vector<8x32xf32>
    %247 = math.exp %246 : vector<8x32xf32>
    %cst_45 = arith.constant 1.000000e+00 : f32
    %248 = vector.broadcast %cst_45 : f32 to vector<8x32xf32>
    %249 = arith.addf %248, %247 : vector<8x32xf32>
    %250 = arith.divf %248, %249 : vector<8x32xf32>
    %251 = arith.mulf %245, %250 : vector<8x32xf32>
    %c0_46 = arith.constant 0 : index
    %c0_47 = arith.constant 0 : index
    %252 = vector.load %arg9[%c0_46, %c0_47] : memref<32x32xbf16, #tpu.memory_space<vmem>>, vector<32x32xbf16>
    %253 = arith.truncf %251 : vector<8x32xf32> to vector<8x32xbf16>
    %cst_48 = arith.constant dense<0.000000e+00> : vector<8x32xf32>
    %254 = tpu.matmul %253, %252, %cst_48 {dimension_numbers = #tpu.dot_dimension_numbers<[1], [0], [0], [1], [0, 0, 1, 1], [], []>} : vector<8x32xbf16>, vector<32x32xbf16>, vector<8x32xf32> -> vector<8x32xf32>
    %255 = arith.addf %143, %254 : vector<8x32xf32>
    %256 = vector.extract_strided_slice %0 {offsets = [16, 0], sizes = [1, 32], strides = [1, 1]} : vector<32x128xf32> to vector<1x32xf32>
    %257 = vector.broadcast %256 : vector<1x32xf32> to vector<8x32xf32>
    %258 = arith.addf %255, %257 : vector<8x32xf32>
    %259 = vector.extract_strided_slice %0 {offsets = [17, 0], sizes = [1, 32], strides = [1, 1]} : vector<32x128xf32> to vector<1x32xf32>
    %260 = vector.extract_strided_slice %0 {offsets = [18, 0], sizes = [1, 32], strides = [1, 1]} : vector<32x128xf32> to vector<1x32xf32>
    %cst_49 = arith.constant dense<0.000000e+00> : vector<8xf32>
    %261 = vector.multi_reduction <add>, %258, %cst_49 [1] : vector<8x32xf32> to vector<8xf32>
    %262 = vector.shape_cast %261 : vector<8xf32> to vector<8x1xf32>
    %cst_50 = arith.constant 3.200000e+01 : f32
    %263 = vector.broadcast %cst_50 : f32 to vector<8x1xf32>
    %264 = arith.divf %262, %263 : vector<8x1xf32>
    %265 = vector.broadcast %264 : vector<8x1xf32> to vector<8x32xf32>
    %266 = arith.subf %258, %265 : vector<8x32xf32>
    %267 = arith.mulf %266, %266 : vector<8x32xf32>
    %cst_51 = arith.constant dense<0.000000e+00> : vector<8xf32>
    %268 = vector.multi_reduction <add>, %267, %cst_51 [1] : vector<8x32xf32> to vector<8xf32>
    %269 = vector.shape_cast %268 : vector<8xf32> to vector<8x1xf32>
    %cst_52 = arith.constant 3.200000e+01 : f32
    %270 = vector.broadcast %cst_52 : f32 to vector<8x1xf32>
    %271 = arith.divf %269, %270 : vector<8x1xf32>
    %272 = vector.broadcast %264 : vector<8x1xf32> to vector<8x32xf32>
    %273 = arith.subf %258, %272 : vector<8x32xf32>
    %cst_53 = arith.constant 9.99999996E-13 : f32
    %274 = vector.broadcast %cst_53 : f32 to vector<8x1xf32>
    %275 = arith.addf %271, %274 : vector<8x1xf32>
    %276 = math.rsqrt %275 : vector<8x1xf32>
    %277 = vector.broadcast %276 : vector<8x1xf32> to vector<8x32xf32>
    %278 = arith.mulf %273, %277 : vector<8x32xf32>
    %279 = vector.broadcast %259 : vector<1x32xf32> to vector<8x32xf32>
    %280 = arith.mulf %278, %279 : vector<8x32xf32>
    %281 = vector.broadcast %260 : vector<1x32xf32> to vector<8x32xf32>
    %282 = arith.addf %280, %281 : vector<8x32xf32>
    %c0_54 = arith.constant 0 : index
    %c0_55 = arith.constant 0 : index
    %283 = vector.load %arg10[%c0_54, %c0_55] : memref<32x64xbf16, #tpu.memory_space<vmem>>, vector<32x64xbf16>
    %284 = vector.extract_strided_slice %0 {offsets = [19, 0], sizes = [1, 64], strides = [1, 1]} : vector<32x128xf32> to vector<1x64xf32>
    %c0_56 = arith.constant 0 : index
    %c0_57 = arith.constant 0 : index
    %285 = vector.load %arg11[%c0_56, %c0_57] : memref<64x32xbf16, #tpu.memory_space<vmem>>, vector<64x32xbf16>
    %286 = vector.extract_strided_slice %0 {offsets = [20, 0], sizes = [1, 32], strides = [1, 1]} : vector<32x128xf32> to vector<1x32xf32>
    %287 = arith.truncf %282 : vector<8x32xf32> to vector<8x32xbf16>
    %cst_58 = arith.constant dense<0.000000e+00> : vector<8x64xf32>
    %288 = tpu.matmul %287, %283, %cst_58 {dimension_numbers = #tpu.dot_dimension_numbers<[1], [0], [0], [1], [0, 0, 1, 1], [], []>} : vector<8x32xbf16>, vector<32x64xbf16>, vector<8x64xf32> -> vector<8x64xf32>
    %289 = vector.broadcast %284 : vector<1x64xf32> to vector<8x64xf32>
    %290 = arith.addf %288, %289 : vector<8x64xf32>
    %291 = arith.negf %290 : vector<8x64xf32>
    %292 = math.exp %291 : vector<8x64xf32>
    %cst_59 = arith.constant 1.000000e+00 : f32
    %293 = vector.broadcast %cst_59 : f32 to vector<8x64xf32>
    %294 = arith.addf %293, %292 : vector<8x64xf32>
    %295 = arith.divf %293, %294 : vector<8x64xf32>
    %296 = arith.mulf %290, %295 : vector<8x64xf32>
    %297 = arith.truncf %296 : vector<8x64xf32> to vector<8x64xbf16>
    %cst_60 = arith.constant dense<0.000000e+00> : vector<8x32xf32>
    %298 = tpu.matmul %297, %285, %cst_60 {dimension_numbers = #tpu.dot_dimension_numbers<[1], [0], [0], [1], [0, 0, 1, 1], [], []>} : vector<8x64xbf16>, vector<64x32xbf16>, vector<8x32xf32> -> vector<8x32xf32>
    %299 = vector.broadcast %286 : vector<1x32xf32> to vector<8x32xf32>
    %300 = arith.addf %298, %299 : vector<8x32xf32>
    %cst_61 = arith.constant 5.000000e-01 : f32
    %301 = vector.broadcast %cst_61 : f32 to vector<8x32xf32>
    %302 = arith.mulf %301, %300 : vector<8x32xf32>
    %303 = arith.addf %258, %302 : vector<8x32xf32>
    %304 = vector.extract_strided_slice %0 {offsets = [21, 0], sizes = [1, 32], strides = [1, 1]} : vector<32x128xf32> to vector<1x32xf32>
    %305 = vector.extract_strided_slice %0 {offsets = [22, 0], sizes = [1, 32], strides = [1, 1]} : vector<32x128xf32> to vector<1x32xf32>
    %cst_62 = arith.constant dense<0.000000e+00> : vector<8xf32>
    %306 = vector.multi_reduction <add>, %303, %cst_62 [1] : vector<8x32xf32> to vector<8xf32>
    %307 = vector.shape_cast %306 : vector<8xf32> to vector<8x1xf32>
    %cst_63 = arith.constant 3.200000e+01 : f32
    %308 = vector.broadcast %cst_63 : f32 to vector<8x1xf32>
    %309 = arith.divf %307, %308 : vector<8x1xf32>
    %310 = vector.broadcast %309 : vector<8x1xf32> to vector<8x32xf32>
    %311 = arith.subf %303, %310 : vector<8x32xf32>
    %312 = arith.mulf %311, %311 : vector<8x32xf32>
    %cst_64 = arith.constant dense<0.000000e+00> : vector<8xf32>
    %313 = vector.multi_reduction <add>, %312, %cst_64 [1] : vector<8x32xf32> to vector<8xf32>
    %314 = vector.shape_cast %313 : vector<8xf32> to vector<8x1xf32>
    %cst_65 = arith.constant 3.200000e+01 : f32
    %315 = vector.broadcast %cst_65 : f32 to vector<8x1xf32>
    %316 = arith.divf %314, %315 : vector<8x1xf32>
    %317 = vector.broadcast %309 : vector<8x1xf32> to vector<8x32xf32>
    %318 = arith.subf %303, %317 : vector<8x32xf32>
    %cst_66 = arith.constant 9.99999996E-13 : f32
    %319 = vector.broadcast %cst_66 : f32 to vector<8x1xf32>
    %320 = arith.addf %316, %319 : vector<8x1xf32>
    %321 = math.rsqrt %320 : vector<8x1xf32>
    %322 = vector.broadcast %321 : vector<8x1xf32> to vector<8x32xf32>
    %323 = arith.mulf %318, %322 : vector<8x32xf32>
    %324 = vector.broadcast %304 : vector<1x32xf32> to vector<8x32xf32>
    %325 = arith.mulf %323, %324 : vector<8x32xf32>
    %326 = vector.broadcast %305 : vector<1x32xf32> to vector<8x32xf32>
    %327 = arith.addf %325, %326 : vector<8x32xf32>
    %328 = vector.shape_cast %327 : vector<8x32xf32> to vector<1x8x32xf32>
    %c0_67 = arith.constant 0 : index
    %c0_68 = arith.constant 0 : index
    %c0_69 = arith.constant 0 : index
    %329 = vector.load %arg12[%c0_67, %c0_68, %c0_69] : memref<1x8x32xf32, #tpu.memory_space<vmem>>, vector<1x8x32xf32>
    tpu.vector_store %arg12[%c0_67, %c0_68, %c0_69], %328 {strides = array<i32>} : memref<1x8x32xf32, #tpu.memory_space<vmem>>, vector<1x8x32xf32>,
    return
  }
  func.func @transform_0(%arg0: i32, %arg1: memref<2xi32, #tpu.memory_space<smem>>) -> (i32, i32, i32) {
    %c0_i32 = arith.constant 0 : i32
    %c0_i32_0 = arith.constant 0 : i32
    %c0_i32_1 = arith.constant 0 : i32
    return %arg0, %c0_i32, %c0_i32_0 : i32, i32, i32
  }
  func.func @transform_1(%arg0: i32, %arg1: memref<2xi32, #tpu.memory_space<smem>>) -> (i32, i32) {
    %c0_i32 = arith.constant 0 : i32
    %c0_i32_0 = arith.constant 0 : i32
    %c0_i32_1 = arith.constant 0 : i32
    return %c0_i32, %c0_i32_0 : i32, i32
  }
  func.func @transform_2(%arg0: i32, %arg1: memref<2xi32, #tpu.memory_space<smem>>) -> (i32, i32) {
    %c0_i32 = arith.constant 0 : i32
    %c0_i32_0 = arith.constant 0 : i32
    %c0_i32_1 = arith.constant 0 : i32
    return %c0_i32, %c0_i32_0 : i32, i32
  }
  func.func @transform_3(%arg0: i32, %arg1: memref<2xi32, #tpu.memory_space<smem>>) -> (i32, i32) {
    %c0_i32 = arith.constant 0 : i32
    %c0_i32_0 = arith.constant 0 : i32
    %c0_i32_1 = arith.constant 0 : i32
    return %c0_i32, %c0_i32_0 : i32, i32
  }
  func.func @transform_4(%arg0: i32, %arg1: memref<2xi32, #tpu.memory_space<smem>>) -> (i32, i32) {
    %c0_i32 = arith.constant 0 : i32
    %c0_i32_0 = arith.constant 0 : i32
    %c0_i32_1 = arith.constant 0 : i32
    return %c0_i32, %c0_i32_0 : i32, i32
  }
  func.func @transform_5(%arg0: i32, %arg1: memref<2xi32, #tpu.memory_space<smem>>) -> (i32, i32) {
    %c0_i32 = arith.constant 0 : i32
    %c0_i32_0 = arith.constant 0 : i32
    %c0_i32_1 = arith.constant 0 : i32
    return %c0_i32, %c0_i32_0 : i32, i32
  }
  func.func @transform_6(%arg0: i32, %arg1: memref<2xi32, #tpu.memory_space<smem>>) -> (i32, i32) {
    %c0_i32 = arith.constant 0 : i32
    %c0_i32_0 = arith.constant 0 : i32
    %c0_i32_1 = arith.constant 0 : i32
    return %c0_i32, %c0_i32_0 : i32, i32
  }
  func.func @transform_7(%arg0: i32, %arg1: memref<2xi32, #tpu.memory_space<smem>>) -> (i32, i32) {
    %c0_i32 = arith.constant 0 : i32
    %c0_i32_0 = arith.constant 0 : i32
    %c0_i32_1 = arith.constant 0 : i32
    return %c0_i32, %c0_i32_0 : i32, i32
  }
  func.func @transform_8(%arg0: i32, %arg1: memref<2xi32, #tpu.memory_space<smem>>) -> (i32, i32) {
    %c0_i32 = arith.constant 0 : i32
    %c0_i32_0 = arith.constant 0 : i32
    %c0_i32_1 = arith.constant 0 : i32
    return %c0_i32, %c0_i32_0 : i32, i32
  }
  func.func @transform_9(%arg0: i32, %arg1: memref<2xi32, #tpu.memory_space<smem>>) -> (i32, i32) {
    %c0_i32 = arith.constant 0 : i32
    %c0_i32_0 = arith.constant 0 : i32
    %c0_i32_1 = arith.constant 0 : i32
    return %c0_i32, %c0_i32_0 : i32, i32
  }
  func.func @transform_10(%arg0: i32, %arg1: memref<2xi32, #tpu.memory_space<smem>>) -> (i32, i32, i32) {
    %c0_i32 = arith.constant 0 : i32
    %c0_i32_0 = arith.constant 0 : i32
    %c0_i32_1 = arith.constant 0 : i32
    return %arg0, %c0_i32, %c0_i32_0 : i32, i32, i32
  }
}

</mosaic_0001>

<llo_original>
// kernel: tpu_custom_call.1
$region0: #{tpu_custom_call.1}
  #allocation0 [shape = 'u32[]', space=smem, size = 0x4, offset = 0x4, fixed_abs, tag = 'smem constant byte address 0x4 - core index']
  #allocation1 [shape = 'u32[144,128]{1,0:T(1,128)}', space=vmem, size = 0x12000, scoped, tag = 'internal scratch']
  #allocation2 [shape = 's32[1]{0}', space=sflag, size = 0x4, scoped, tag = 'scoped memory for tpu_custom_call.1']
  #allocation3 [shape = 'u8[512]{0}', space=smem, size = 0x200, scoped, tag = 'prefetched SMEM operand 0']
  %s0 = inlined_call_operand.hbm [shape: s32[2], index: 0, kind: input, shape index: {}]
  %s1 = inlined_call_operand.vmem [shape: f32[2,8,32], index: 1, kind: input, shape index: {}]
  %s2 = inlined_call_operand.vmem [shape: f32[32,128], index: 2, kind: input, shape index: {}]
  %s3 = inlined_call_operand.vmem [shape: bf16[32,64], index: 3, kind: input, shape index: {}]
  %s4 = inlined_call_operand.vmem [shape: bf16[64,32], index: 4, kind: input, shape index: {}]
  %s5 = inlined_call_operand.vmem [shape: bf16[32,96], index: 5, kind: input, shape index: {}]
  %s6 = inlined_call_operand.vmem [shape: bf16[32,32], index: 6, kind: input, shape index: {}]
  %s7 = inlined_call_operand.vmem [shape: bf16[32,64], index: 7, kind: input, shape index: {}]
  %s8 = inlined_call_operand.hbm [shape: bf16[32,32], index: 8, kind: input, shape index: {}]
  %s9 = inlined_call_operand.vmem [shape: bf16[32,64], index: 9, kind: input, shape index: {}]
  %s10 = inlined_call_operand.vmem [shape: bf16[64,32], index: 10, kind: input, shape index: {}]
  %s11 = inlined_call_operand.hbm [shape: f32[2,8,32], index: 11, kind: output, shape index: {}]
  %s12 = sld [smem:[#allocation0]]
  $region77: #{tpu_custom_call.1} parent=0
    _
  %s14 = ssub.s32 1, %s12
  %s15 = scalar_select 0, %s14, %s12
  %17 = dma.hbm_to_smem %s0, 16, [#allocation3], [#allocation2]
  %18 = dma.done [#allocation2], 16
  %19 = sfence
  $region1: #{tpu_custom_call.1} parent=0
    #allocation4 [shape = 'u8[8192]{0}', space=vmem, size = 0x2000, scoped, tag = 'input window, operand 8, single buffered']
    #allocation5 [shape = 's32[2]{0}', space=sflag, size = 0x8, scoped, tag = 'scoped memory for tpu_custom_call.1']
    #allocation6 [shape = 's32[2]{0}', space=sflag, size = 0x8, scoped, tag = 'scoped memory for tpu_custom_call.1']
    #allocation7 [shape = 'u8[8192]{0}', space=vmem, size = 0x2000, scoped, tag = 'output window, operand 0']
    %20 = vsyncpa [#allocation5], 0
    %21 = vsyncpa [#allocation6], 0
    %s22 = scalar_lea.sflag [#allocation6], 1
    %23 = vsyncpa %s22, 0
    loop: start=0, step=1, limit=4
    $region2: #{tpu_custom_call.1} parent=1 // loop_pre_header
      _
    $region3: #{tpu_custom_call.1} parent=1 // loop_header
      %s25 = sphi 0, %s29
      %p26 = scmp.ge.s32.totalorder %s25, 4
      %s35 = sphi 0, %s37
      %s38 = sphi 0, %s35
      %s39 = sphi 0, %s38
      %s55 = sphi 0, %s39
      %s59 = sphi 0, %s59
      %s61 = sphi 0, %s59
      %s62 = sphi 0, %s61
      %s76 = sphi 0, %s62
      %s80 = sphi 0, %s80
      %s82 = sphi 0, %s80
      %s83 = sphi 0, %s82
      %s97 = sphi 0, %s83
      %s101 = sphi 0, %s101
      %s103 = sphi 0, %s101
      %s104 = sphi 0, %s103
      %s118 = sphi 0, %s104
      %s122 = sphi 0, %s122
      %s124 = sphi 0, %s122
      %s125 = sphi 0, %s124
      %s139 = sphi 0, %s125
      %s143 = sphi 0, %s143
      %s145 = sphi 0, %s143
      %s146 = sphi 0, %s145
      %s160 = sphi 0, %s146
      %s164 = sphi 0, %s164
      %s166 = sphi 0, %s164
      %s167 = sphi 0, %s166
      %s181 = sphi 0, %s167
      %s185 = sphi 0, %s185
      %s187 = sphi 0, %s185
      %s188 = sphi 0, %s187
      %s202 = sphi 0, %s188
      %s206 = sphi 0, %s206
      %s208 = sphi 0, %s206
      %s209 = sphi 0, %s208
      %s223 = sphi 0, %s209
      %s227 = sphi 0, %s227
      %s229 = sphi 0, %s227
      %s230 = sphi 0, %s229
      %s244 = sphi 0, %s230
      %s250 = sphi 0, %s252
      %s253 = sphi 0, %s250
      %s254 = sphi 0, %s253
      %s270 = sphi 0, %s254
    $region4: #{tpu_custom_call.1} parent=1 // loop_header_branch
      %28 = sbr.rel (%p26) target = $region8
    $region5: #{tpu_custom_call.1} parent=1 // loop_body
      %s30 = ssub.s32 %s25, 1
      %s31 = ssub.s32 %s25, 2
      %s32 = sadd.s32 %s25, 1
      %s33 = ssub.s32 %s25, %s32
      %p34 = scmp.eq.s32.totalorder %s33, 0
      %s36 = sadd.s32 %s35, 1
      %s37 = scalar_select %p34, %s35, %s36
      %p40 = pneg %p34
      %p41 = scmp.eq.s32.totalorder %s25, 1
      %p42 = por %p40, %p41
      %p43 = scmp.ne.s32.totalorder %s35, %s38
      %p44 = scmp.eq.s32.totalorder %s25, 0
      %p45 = por %p43, %p44
      %p46 = scmp.ne.s32.totalorder %s35, %s38
      %p47 = scmp.eq.s32.totalorder %s30, 1
      %p48 = por %p46, %p47
      %p49 = scmp.ne.s32.totalorder %s38, %s39
      %p50 = scmp.eq.s32.totalorder %s30, 0
      %p51 = por %p49, %p50
      %p52 = scmp.ne.s32.totalorder %s38, %s39
      %p53 = scmp.eq.s32.totalorder %s31, 1
      %p54 = por %p52, %p53
      %p56 = scmp.ne.s32.totalorder %s39, %s55
      %p57 = scmp.eq.s32.totalorder %s31, 0
      %p58 = por %p56, %p57
      %s60 = sadd.s32 %s59, 1
      %p63 = scmp.eq.s32.totalorder %s25, 1
      %p64 = scmp.ne.s32.totalorder %s59, %s61
      %p65 = scmp.eq.s32.totalorder %s25, 0
      %p66 = por %p64, %p65
      %p67 = scmp.ne.s32.totalorder %s59, %s61
      %p68 = scmp.eq.s32.totalorder %s30, 1
      %p69 = por %p67, %p68
      %p70 = scmp.ne.s32.totalorder %s61, %s62
      %p71 = scmp.eq.s32.totalorder %s30, 0
      %p72 = por %p70, %p71
      %p73 = scmp.ne.s32.totalorder %s61, %s62
      %p74 = scmp.eq.s32.totalorder %s31, 1
      %p75 = por %p73, %p74
      %p77 = scmp.ne.s32.totalorder %s62, %s76
      %p78 = scmp.eq.s32.totalorder %s31, 0
      %p79 = por %p77, %p78
      %s81 = sadd.s32 %s80, 1
      %p84 = scmp.eq.s32.totalorder %s25, 1
      %p85 = scmp.ne.s32.totalorder %s80, %s82
      %p86 = scmp.eq.s32.totalorder %s25, 0
      %p87 = por %p85, %p86
      %p88 = scmp.ne.s32.totalorder %s80, %s82
      %p89 = scmp.eq.s32.totalorder %s30, 1
      %p90 = por %p88, %p89
      %p91 = scmp.ne.s32.totalorder %s82, %s83
      %p92 = scmp.eq.s32.totalorder %s30, 0
      %p93 = por %p91, %p92
      %p94 = scmp.ne.s32.totalorder %s82, %s83
      %p95 = scmp.eq.s32.totalorder %s31, 1
      %p96 = por %p94, %p95
      %p98 = scmp.ne.s32.totalorder %s83, %s97
      %p99 = scmp.eq.s32.totalorder %s31, 0
      %p100 = por %p98, %p99
      %s102 = sadd.s32 %s101, 1
      %p105 = scmp.eq.s32.totalorder %s25, 1
      %p106 = scmp.ne.s32.totalorder %s101, %s103
      %p107 = scmp.eq.s32.totalorder %s25, 0
      %p108 = por %p106, %p107
      %p109 = scmp.ne.s32.totalorder %s101, %s103
      %p110 = scmp.eq.s32.totalorder %s30, 1
      %p111 = por %p109, %p110
      %p112 = scmp.ne.s32.totalorder %s103, %s104
      %p113 = scmp.eq.s32.totalorder %s30, 0
      %p114 = por %p112, %p113
      %p115 = scmp.ne.s32.totalorder %s103, %s104
      %p116 = scmp.eq.s32.totalorder %s31, 1
      %p117 = por %p115, %p116
      %p119 = scmp.ne.s32.totalorder %s104, %s118
      %p120 = scmp.eq.s32.totalorder %s31, 0
      %p121 = por %p119, %p120
      %s123 = sadd.s32 %s122, 1
      %p126 = scmp.eq.s32.totalorder %s25, 1
      %p127 = scmp.ne.s32.totalorder %s122, %s124
      %p128 = scmp.eq.s32.totalorder %s25, 0
      %p129 = por %p127, %p128
      %p130 = scmp.ne.s32.totalorder %s122, %s124
      %p131 = scmp.eq.s32.totalorder %s30, 1
      %p132 = por %p130, %p131
      %p133 = scmp.ne.s32.totalorder %s124, %s125
      %p134 = scmp.eq.s32.totalorder %s30, 0
      %p135 = por %p133, %p134
      %p136 = scmp.ne.s32.totalorder %s124, %s125
      %p137 = scmp.eq.s32.totalorder %s31, 1
      %p138 = por %p136, %p137
      %p140 = scmp.ne.s32.totalorder %s125, %s139
      %p141 = scmp.eq.s32.totalorder %s31, 0
      %p142 = por %p140, %p141
      %s144 = sadd.s32 %s143, 1
      %p147 = scmp.eq.s32.totalorder %s25, 1
      %p148 = scmp.ne.s32.totalorder %s143, %s145
      %p149 = scmp.eq.s32.totalorder %s25, 0
      %p150 = por %p148, %p149
      %p151 = scmp.ne.s32.totalorder %s143, %s145
      %p152 = scmp.eq.s32.totalorder %s30, 1
      %p153 = por %p151, %p152
      %p154 = scmp.ne.s32.totalorder %s145, %s146
      %p155 = scmp.eq.s32.totalorder %s30, 0
      %p156 = por %p154, %p155
      %p157 = scmp.ne.s32.totalorder %s145, %s146
      %p158 = scmp.eq.s32.totalorder %s31, 1
      %p159 = por %p157, %p158
      %p161 = scmp.ne.s32.totalorder %s146, %s160
      %p162 = scmp.eq.s32.totalorder %s31, 0
      %p163 = por %p161, %p162
      %s165 = sadd.s32 %s164, 1
      %p168 = scmp.eq.s32.totalorder %s25, 1
      %p169 = scmp.ne.s32.totalorder %s164, %s166
      %p170 = scmp.eq.s32.totalorder %s25, 0
      %p171 = por %p169, %p170
      %p172 = scmp.ne.s32.totalorder %s164, %s166
      %p173 = scmp.eq.s32.totalorder %s30, 1
      %p174 = por %p172, %p173
      %p175 = scmp.ne.s32.totalorder %s166, %s167
      %p176 = scmp.eq.s32.totalorder %s30, 0
      %p177 = por %p175, %p176
      %p178 = scmp.ne.s32.totalorder %s166, %s167
      %p179 = scmp.eq.s32.totalorder %s31, 1
      %p180 = por %p178, %p179
      %p182 = scmp.ne.s32.totalorder %s167, %s181
      %p183 = scmp.eq.s32.totalorder %s31, 0
      %p184 = por %p182, %p183
      %s186 = sadd.s32 %s185, 1
      %p189 = scmp.eq.s32.totalorder %s25, 1
      %p190 = scmp.ne.s32.totalorder %s185, %s187
      %p191 = scmp.eq.s32.totalorder %s25, 0
      %p192 = por %p190, %p191
      %p193 = scmp.ne.s32.totalorder %s185, %s187
      %p194 = scmp.eq.s32.totalorder %s30, 1
      %p195 = por %p193, %p194
      %p196 = scmp.ne.s32.totalorder %s187, %s188
      %p197 = scmp.eq.s32.totalorder %s30, 0
      %p198 = por %p196, %p197
      %p199 = scmp.ne.s32.totalorder %s187, %s188
      %p200 = scmp.eq.s32.totalorder %s31, 1
      %p201 = por %p199, %p200
      %p203 = scmp.ne.s32.totalorder %s188, %s202
      %p204 = scmp.eq.s32.totalorder %s31, 0
      %p205 = por %p203, %p204
      %s207 = sadd.s32 %s206, 1
      %p210 = scmp.eq.s32.totalorder %s25, 1
      %p211 = scmp.ne.s32.totalorder %s206, %s208
      %p212 = scmp.eq.s32.totalorder %s25, 0
      %p213 = por %p211, %p212
      %p214 = scmp.ne.s32.totalorder %s206, %s208
      %p215 = scmp.eq.s32.totalorder %s30, 1
      %p216 = por %p214, %p215
      %p217 = scmp.ne.s32.totalorder %s208, %s209
      %p218 = scmp.eq.s32.totalorder %s30, 0
      %p219 = por %p217, %p218
      %p220 = scmp.ne.s32.totalorder %s208, %s209
      %p221 = scmp.eq.s32.totalorder %s31, 1
      %p222 = por %p220, %p221
      %p224 = scmp.ne.s32.totalorder %s209, %s223
      %p225 = scmp.eq.s32.totalorder %s31, 0
      %p226 = por %p224, %p225
      %s228 = sadd.s32 %s227, 1
      %p231 = scmp.eq.s32.totalorder %s25, 1
      %p232 = scmp.ne.s32.totalorder %s227, %s229
      %p233 = scmp.eq.s32.totalorder %s25, 0
      %p234 = por %p232, %p233
      %p235 = scmp.ne.s32.totalorder %s227, %s229
      %p236 = scmp.eq.s32.totalorder %s30, 1
      %p237 = por %p235, %p236
      %p238 = scmp.ne.s32.totalorder %s229, %s230
      %p239 = scmp.eq.s32.totalorder %s30, 0
      %p240 = por %p238, %p239
      %p241 = scmp.ne.s32.totalorder %s229, %s230
      %p242 = scmp.eq.s32.totalorder %s31, 1
      %p243 = por %p241, %p242
      %p245 = scmp.ne.s32.totalorder %s230, %s244
      %p246 = scmp.eq.s32.totalorder %s31, 0
      %p247 = por %p245, %p246
      %s248 = ssub.s32 %s25, %s32
      %p249 = scmp.eq.s32.totalorder %s248, 0
      %s251 = sadd.s32 %s250, 1
      %s252 = scalar_select %p249, %s250, %s251
      %p255 = pneg %p249
      %p256 = scmp.eq.s32.totalorder %s25, 1
      %p257 = por %p255, %p256
      %p258 = scmp.ne.s32.totalorder %s250, %s253
      %p259 = scmp.eq.s32.totalorder %s25, 0
      %p260 = por %p258, %p259
      %p261 = scmp.ne.s32.totalorder %s250, %s253
      %p262 = scmp.eq.s32.totalorder %s30, 1
      %p263 = por %p261, %p262
      %p264 = scmp.ne.s32.totalorder %s253, %s254
      %p265 = scmp.eq.s32.totalorder %s30, 0
      %p266 = por %p264, %p265
      %p267 = scmp.ne.s32.totalorder %s253, %s254
      %p268 = scmp.eq.s32.totalorder %s31, 1
      %p269 = por %p267, %p268
      %p271 = scmp.ne.s32.totalorder %s254, %s270
      %p272 = scmp.eq.s32.totalorder %s31, 0
      %p273 = por %p271, %p272
      %p274 = scmp.le.s32.totalorder 1, %s25
      %p275 = scmp.lt.s32.totalorder %s25, 3
      %p276 = pnand %p274, %p275
      %p277 = pneg %p276
      // Predicated region
      $region9: #{tpu_custom_call.1} parent=5 // pred_check
        _
      $region10: #{tpu_custom_call.1} parent=5 // pred_check_branch
        %279 = sbr.rel (%p276) target = $region12
      $region11: #{tpu_custom_call.1} parent=5 // pred_region
        %s280 = ssub.s32 %s25, 1
        // Predicated region
        $region13: #{tpu_custom_call.1} parent=11 // pred_check
          %p281 = pneg %p72
        $region14: #{tpu_custom_call.1} parent=11 // pred_check_branch
          %283 = sbr.rel (%p281) target = $region16
        $region15: #{tpu_custom_call.1} parent=11 // pred_region
          _
        $region16: #{tpu_custom_call.1} parent=11 // pred_fallthru
          _
        // Predicated region
        $region17: #{tpu_custom_call.1} parent=11 // pred_check
          %p284 = pneg %p93
        $region18: #{tpu_custom_call.1} parent=11 // pred_check_branch
          %286 = sbr.rel (%p284) target = $region20
        $region19: #{tpu_custom_call.1} parent=11 // pred_region
          _
        $region20: #{tpu_custom_call.1} parent=11 // pred_fallthru
          _
        // Predicated region
        $region21: #{tpu_custom_call.1} parent=11 // pred_check
          %p287 = pneg %p114
        $region22: #{tpu_custom_call.1} parent=11 // pred_check_branch
          %289 = sbr.rel (%p287) target = $region24
        $region23: #{tpu_custom_call.1} parent=11 // pred_region
          _
        $region24: #{tpu_custom_call.1} parent=11 // pred_fallthru
          _
        // Predicated region
        $region25: #{tpu_custom_call.1} parent=11 // pred_check
          %p290 = pneg %p135
        $region26: #{tpu_custom_call.1} parent=11 // pred_check_branch
          %292 = sbr.rel (%p290) target = $region28
        $region27: #{tpu_custom_call.1} parent=11 // pred_region
          _
        $region28: #{tpu_custom_call.1} parent=11 // pred_fallthru
          _
        // Predicated region
        $region29: #{tpu_custom_call.1} parent=11 // pred_check
          %p293 = pneg %p156
        $region30: #{tpu_custom_call.1} parent=11 // pred_check_branch
          %295 = sbr.rel (%p293) target = $region32
        $region31: #{tpu_custom_call.1} parent=11 // pred_region
          _
        $region32: #{tpu_custom_call.1} parent=11 // pred_fallthru
          _
        // Predicated region
        $region33: #{tpu_custom_call.1} parent=11 // pred_check
          %p296 = pneg %p177
        $region34: #{tpu_custom_call.1} parent=11 // pred_check_branch
          %298 = sbr.rel (%p296) target = $region36
        $region35: #{tpu_custom_call.1} parent=11 // pred_region
          _
        $region36: #{tpu_custom_call.1} parent=11 // pred_fallthru
          _
        // Predicated region
        $region37: #{tpu_custom_call.1} parent=11 // pred_check
          %p299 = pneg %p198
        $region38: #{tpu_custom_call.1} parent=11 // pred_check_branch
          %301 = sbr.rel (%p299) target = $region40
        $region39: #{tpu_custom_call.1} parent=11 // pred_region
          %s303 = ssub.s32 256, 256
          %304 = vsyncadd [#allocation5], %s303
          %s305 = sshll.u32 [#allocation4], 4
          %s306 = int_to_ptr.vmem [resolvable:$true] %s305
          %311 = dma.hbm_to_vmem [thread:$0]  %s8, 256, %s306, [#allocation5], 64, 64, 4
        $region40: #{tpu_custom_call.1} parent=11 // pred_fallthru
          _
        // Predicated region
        $region41: #{tpu_custom_call.1} parent=11 // pred_check
          %p312 = pneg %p219
        $region42: #{tpu_custom_call.1} parent=11 // pred_check_branch
          %314 = sbr.rel (%p312) target = $region44
        $region43: #{tpu_custom_call.1} parent=11 // pred_region
          _
        $region44: #{tpu_custom_call.1} parent=11 // pred_fallthru
          _
        // Predicated region
        $region45: #{tpu_custom_call.1} parent=11 // pred_check
          %p315 = pneg %p240
        $region46: #{tpu_custom_call.1} parent=11 // pred_check_branch
          %317 = sbr.rel (%p315) target = $region48
        $region47: #{tpu_custom_call.1} parent=11 // pred_region
          _
        $region48: #{tpu_custom_call.1} parent=11 // pred_fallthru
          _
      $region12: #{tpu_custom_call.1} parent=5 // pred_fallthru
        _
      %p318 = scmp.lt.s32.totalorder %s25, 2
      // Predicated region
      $region49: #{tpu_custom_call.1} parent=5 // pred_check
        %p319 = pneg %p318
      $region50: #{tpu_custom_call.1} parent=5 // pred_check_branch
        %321 = sbr.rel (%p319) target = $region52
      $region51: #{tpu_custom_call.1} parent=5 // pred_region
        // Predicated region
        $region53: #{tpu_custom_call.1} parent=51 // pred_check
          %p322 = pneg %p45
        $region54: #{tpu_custom_call.1} parent=51 // pred_check_branch
          %324 = sbr.rel (%p322) target = $region56
        $region55: #{tpu_custom_call.1} parent=51 // pred_region
          %p325 = scmp.lt.s32.totalorder %s25, 1
          %s326 = scalar_select %p325, %s25, 1
          %s327 = smul.addr %s326, 8
          %s328 = scalar_lea.vmem %s1, %s327
        $region56: #{tpu_custom_call.1} parent=51 // pred_fallthru
          _
      $region52: #{tpu_custom_call.1} parent=5 // pred_fallthru
        _
      %p329 = scmp.le.s32.totalorder 1, %s25
      %p330 = scmp.lt.s32.totalorder %s25, 3
      %p331 = pnand %p329, %p330
      %p332 = pneg %p331
      // Predicated region
      $region57: #{tpu_custom_call.1} parent=5 // pred_check
        _
      $region58: #{tpu_custom_call.1} parent=5 // pred_check_branch
        %334 = sbr.rel (%p331) target = $region60
      $region59: #{tpu_custom_call.1} parent=5 // pred_region
        %s335 = ssub.s32 %s25, 1
        // Predicated region
        $region61: #{tpu_custom_call.1} parent=59 // pred_check
          %p336 = pneg %p198
        $region62: #{tpu_custom_call.1} parent=59 // pred_check_branch
          %338 = sbr.rel (%p336) target = $region64
        $region63: #{tpu_custom_call.1} parent=59 // pred_region
          %339 = dma.done [#allocation5], 256
        $region64: #{tpu_custom_call.1} parent=59 // pred_fallthru
          _
        %p340 = scmp.lt.s32.totalorder %s30, 1
        %s341 = scalar_select %p340, %s30, 1
        %s342 = smul.addr %s341, 8
        %s343 = scalar_lea.vmem %s1, %s342
        %p344 = pneg %p51
        %p345 = pneg %p48
        %p346 = pneg %p72
        %p347 = pneg %p69
        %p348 = pneg %p93
        %p349 = pneg %p90
        %p350 = pneg %p114
        %p351 = pneg %p111
        %p352 = pneg %p135
        %p353 = pneg %p132
        %p354 = pneg %p156
        %p355 = pneg %p153
        %p356 = pneg %p177
        %p357 = pneg %p174
        %p358 = pneg %p198
        %p359 = pneg %p195
        %p360 = pneg %p219
        %p361 = pneg %p216
        %p362 = pneg %p240
        %p363 = pneg %p237
        %p364 = pneg %p266
        %p365 = pneg %p263
        %s366 = sand.u32 %s253, 1
        %s367 = scalar_lea.sflag [#allocation6], %s366
        %s368 = sand.u32 %s253, 1
        %s369 = smul.addr %s368, 8
        %s370 = scalar_lea.vmem [#allocation7], %s369
        %p371 = scmp.lt.s32.totalorder %s30, 1
        %s372 = scalar_select %p371, %s30, 1
        %s373 = smul.addr %s372, 8
        %s374 = scalar_lea.vmem %s1, %s373
        %v376 = vld [vmem:[%s2] sm:$0xff]
        %v377 = vld [vmem:[%s2 + $0x8] sm:$0xff]
        %v378 = vld [vmem:[%s2 + $0x10] sm:$0xff]
        %v379 = vld [vmem:[%s2 + $0x18] sm:$0xff]
        %v380 = vld [vmem:[%s374] sm:$0xff]
        %vm381 = vcmask 261120
        %v382 = vsel %vm381, %v380, 0.0
        %383 = vadd.xlane.f32.xlu0 %v382
        %v384 = vpop.xlane.xlu0 %383
        %v385 = vrcp.pop 32.0
        %v386 = vmul.f32 %v384, %v385
        %v387 = vsub.f32 %v380, %v386
        %v388 = vmul.f32 %v387, %v387
        %v389 = vsel %vm381, %v388, 0.0
        %390 = vadd.xlane.f32.xlu0 %v389
        %v391 = vpop.xlane.xlu0 %390
        %v392 = vmul.f32 %v391, %v385
        %v393 = vadd.f32 %v392, 1e-12
        %v394 = vrsqrt.pop %v393
        %v395 = vmul.f32 %v387, %v394
        %v396 = vlaneseq
        %v397 = vshrl.u32 %v396, 7
        %v398 = vsub.s32 0, %v397
        %v399 = vrot.slane %v376, %v398
        %v400 = vmul.f32 %v395, %v399
        %v401 = vlaneseq
        %v402 = vshrl.u32 %v401, 7
        %v403 = vsub.s32 1, %v402
        %v404 = vrot.slane %v376, %v403
        %v405 = vadd.f32 %v400, %v404
        %v406 = vld [vmem:[%s3] sm:$0xf]
        %v407 = vld [vmem:[%s3 + $0x4] sm:$0xf]
        %v408 = vld [vmem:[%s3 + $0x8] sm:$0xf]
        %v409 = vld [vmem:[%s3 + $0xc] sm:$0xf]
        %v410 = vld [vmem:[%s4] sm:$0xf]
        %v411 = vld [vmem:[%s4 + $0x4] sm:$0xf]
        %v412 = vld [vmem:[%s4 + $0x8] sm:$0xf]
        %v413 = vld [vmem:[%s4 + $0xc] sm:$0xf]
        %v414 = vld [vmem:[%s4 + $0x10] sm:$0xf]
        %v415 = vld [vmem:[%s4 + $0x14] sm:$0xf]
        %v416 = vld [vmem:[%s4 + $0x18] sm:$0xf]
        %v417 = vld [vmem:[%s4 + $0x1c] sm:$0xf]
        %v418 = vpack.c.bf16 %v405, %v405
        %v419 = vlaneseq
        %v420 = vshrl.u32 %v419, 7
        %v421 = vsub.s32 2, %v420
        %v422 = vrot.slane %v376, %v421
        %v427 = vunpack.c.l.b16 %v406
        %v428 = vunpack.c.l.b16 %v407
        %v429 = vunpack.c.l.b16 %v408
        %v430 = vunpack.c.l.b16 %v409
        %v431 = vpack.c.b16 %v428, %v427
        %v432 = vpack.c.b16 %v430, %v429
        %v436 = vsel %vm381, %v418, 0
        %438 = vmatprep.subr.bf16.mxu0 0
        %439 = vmatpush1.bf16.msra.mxu0 %v431
        %440 = vmatprep.subr.bf16.mxu0 0
        %441 = vmatpush1.bf16.msra.mxu0 %v432
        %442 = vmatprep.subr.bf16.mxu0 0
        %443 = vmatpush1.bf16.msra.mxu0 0
        %444 = vmatprep.subr.bf16.mxu0 0
        %445 = vmatpush1.bf16.msra.mxu0 0
        %446 = vmatprep.subr.bf16.mxu0 0
        %447 = vmatpush1.bf16.msra.mxu0 0
        %448 = vmatprep.subr.bf16.mxu0 0
        %449 = vmatpush1.bf16.msra.mxu0 0
        %450 = vmatprep.subr.bf16.mxu0 0
        %451 = vmatpush1.bf16.msra.mxu0 0
        %452 = vmatprep.subr.bf16.mxu0 0
        %453 = vmatpush1.bf16.msra.mxu0 0
        %454 = vmatprep.subr.bf16.mxu0 0
        %455 = vmatpush1.bf16.msra.mxu0 0
        %456 = vmatprep.subr.bf16.mxu0 0
        %457 = vmatpush1.bf16.msra.mxu0 0
        %458 = vmatprep.subr.bf16.mxu0 0
        %459 = vmatpush1.bf16.msra.mxu0 0
        %460 = vmatprep.subr.bf16.mxu0 0
        %461 = vmatpush1.bf16.msra.mxu0 0
        %462 = vmatprep.subr.bf16.mxu0 0
        %463 = vmatpush1.bf16.msra.mxu0 0
        %464 = vmatprep.subr.bf16.mxu0 0
        %465 = vmatpush1.bf16.msra.mxu0 0
        %466 = vmatprep.subr.bf16.mxu0 0
        %467 = vmatpush1.bf16.msra.mxu0 0
        %468 = vmatprep.subr.bf16.mxu0 0
        %469 = vmatpush1.bf16.msra.mxu0 0
        %470 = vmatprep.mubr.bf16.mxu0 0
        %471 = vmatmul.mubr.bf16.gmra.mrb[0].mxu0 %v436
        %v472 = vpop.f32.mrb[0].mxu0
        %v473 = vadd.f32 %v422, %v472
        %v474 = vpop.f32.mrb[0].mxu0
        %v475 = vpop.f32.mrb[0].mxu0
        %v476 = vpop.f32.mrb[0].mxu0
        %477 = vdwg.mxu0
        %v478 = vxor.u32 %v473, 2147483648
        %v479 = vmul.f32 %v478, 1.442695
        %v480 = vpow.pop %v479
        %v481 = vadd.f32 %v480, 1.0
        %v482 = vrcp.pop %v481
        %v483 = vmul.f32 1.0, %v482
        %v484 = vmul.f32 %v473, %v483
        %v485 = vpack.c.bf16 %v484, %v484
        %v486 = vlaneseq
        %v487 = vshrl.u32 %v486, 7
        %v488 = vsub.s32 3, %v487
        %v489 = vrot.slane %v376, %v488
        %v498 = vunpack.c.l.b16 %v410
        %v499 = vunpack.c.l.b16 %v411
        %v500 = vunpack.c.l.b16 %v412
        %v501 = vunpack.c.l.b16 %v413
        %v502 = vunpack.c.l.b16 %v414
        %v503 = vunpack.c.l.b16 %v415
        %v504 = vunpack.c.l.b16 %v416
        %v505 = vunpack.c.l.b16 %v417
        %v506 = vpack.c.b16 %v499, %v498
        %v507 = vpack.c.b16 %v501, %v500
        %v508 = vpack.c.b16 %v503, %v502
        %v509 = vpack.c.b16 %v505, %v504
        %vm514 = vcmask 523264
        %v516 = vsel %vm514, %v485, 0
        %518 = vmatprep.subr.bf16.mxu0 0
        %519 = vmatpush1.bf16.msra.mxu0 %v506
        %520 = vmatprep.subr.bf16.mxu0 0
        %521 = vmatpush1.bf16.msra.mxu0 %v507
        %522 = vmatprep.subr.bf16.mxu0 0
        %523 = vmatpush1.bf16.msra.mxu0 %v508
        %524 = vmatprep.subr.bf16.mxu0 0
        %525 = vmatpush1.bf16.msra.mxu0 %v509
        %526 = vmatprep.subr.bf16.mxu0 0
        %527 = vmatpush1.bf16.msra.mxu0 0
        %528 = vmatprep.subr.bf16.mxu0 0
        %529 = vmatpush1.bf16.msra.mxu0 0
        %530 = vmatprep.subr.bf16.mxu0 0
        %531 = vmatpush1.bf16.msra.mxu0 0
        %532 = vmatprep.subr.bf16.mxu0 0
        %533 = vmatpush1.bf16.msra.mxu0 0
        %534 = vmatprep.subr.bf16.mxu0 0
        %535 = vmatpush1.bf16.msra.mxu0 0
        %536 = vmatprep.subr.bf16.mxu0 0
        %537 = vmatpush1.bf16.msra.mxu0 0
        %538 = vmatprep.subr.bf16.mxu0 0
        %539 = vmatpush1.bf16.msra.mxu0 0
        %540 = vmatprep.subr.bf16.mxu0 0
        %541 = vmatpush1.bf16.msra.mxu0 0
        %542 = vmatprep.subr.bf16.mxu0 0
        %543 = vmatpush1.bf16.msra.mxu0 0
        %544 = vmatprep.subr.bf16.mxu0 0
        %545 = vmatpush1.bf16.msra.mxu0 0
        %546 = vmatprep.subr.bf16.mxu0 0
        %547 = vmatpush1.bf16.msra.mxu0 0
        %548 = vmatprep.subr.bf16.mxu0 0
        %549 = vmatpush1.bf16.msra.mxu0 0
        %550 = vmatprep.mubr.bf16.mxu0 0
        %551 = vmatmul.mubr.bf16.gmra.mrb[0].mxu0 %v516
        %v552 = vpop.f32.mrb[0].mxu0
        %v553 = vadd.f32 %v489, %v552
        %v554 = vpop.f32.mrb[0].mxu0
        %v555 = vpop.f32.mrb[0].mxu0
        %v556 = vpop.f32.mrb[0].mxu0
        %557 = vdwg.mxu0
        %v558 = vmul.f32 %v553, 0.5
        %v559 = vadd.f32 %v380, %v558
        %v560 = vsel %vm381, %v559, 0.0
        %561 = vadd.xlane.f32.xlu0 %v560
        %v562 = vpop.xlane.xlu0 %561
        %v563 = vmul.f32 %v562, %v385
        %v564 = vsub.f32 %v559, %v563
        %v565 = vmul.f32 %v564, %v564
        %v566 = vsel %vm381, %v565, 0.0
        %567 = vadd.xlane.f32.xlu0 %v566
        %v568 = vpop.xlane.xlu0 %567
        %v569 = vmul.f32 %v568, %v385
        %v570 = vadd.f32 %v569, 1e-12
        %v571 = vrsqrt.pop %v570
        %v572 = vmul.f32 %v564, %v571
        %v573 = vlaneseq
        %v574 = vshrl.u32 %v573, 7
        %v575 = vsub.s32 4, %v574
        %v576 = vrot.slane %v376, %v575
        %v577 = vmul.f32 %v572, %v576
        %v578 = vlaneseq
        %v579 = vshrl.u32 %v578, 7
        %v580 = vsub.s32 5, %v579
        %v581 = vrot.slane %v376, %v580
        %v582 = vadd.f32 %v577, %v581
        %v583 = vld [vmem:[%s5] sm:$0xf]
        %v584 = vld [vmem:[%s5 + $0x4] sm:$0xf]
        %v585 = vld [vmem:[%s5 + $0x8] sm:$0xf]
        %v586 = vld [vmem:[%s5 + $0xc] sm:$0xf]
        %v587 = vpack.c.bf16 %v582, %v582
        %v588 = vlaneseq
        %v589 = vshrl.u32 %v588, 7
        %v590 = vsub.s32 6, %v589
        %v591 = vrot.slane %v376, %v590
        %v596 = vunpack.c.l.b16 %v583
        %v597 = vunpack.c.l.b16 %v584
        %v598 = vunpack.c.l.b16 %v585
        %v599 = vunpack.c.l.b16 %v586
        %v600 = vpack.c.b16 %v597, %v596
        %v601 = vpack.c.b16 %v599, %v598
        %v605 = vsel %vm381, %v587, 0
        %607 = vmatprep.subr.bf16.mxu0 0
        %608 = vmatpush1.bf16.msra.mxu0 %v600
        %609 = vmatprep.subr.bf16.mxu0 0
        %610 = vmatpush1.bf16.msra.mxu0 %v601
        %611 = vmatprep.subr.bf16.mxu0 0
        %612 = vmatpush1.bf16.msra.mxu0 0
        %613 = vmatprep.subr.bf16.mxu0 0
        %614 = vmatpush1.bf16.msra.mxu0 0
        %615 = vmatprep.subr.bf16.mxu0 0
        %616 = vmatpush1.bf16.msra.mxu0 0
        %617 = vmatprep.subr.bf16.mxu0 0
        %618 = vmatpush1.bf16.msra.mxu0 0
        %619 = vmatprep.subr.bf16.mxu0 0
        %620 = vmatpush1.bf16.msra.mxu0 0
        %621 = vmatprep.subr.bf16.mxu0 0
        %622 = vmatpush1.bf16.msra.mxu0 0
        %623 = vmatprep.subr.bf16.mxu0 0
        %624 = vmatpush1.bf16.msra.mxu0 0
        %625 = vmatprep.subr.bf16.mxu0 0
        %626 = vmatpush1.bf16.msra.mxu0 0
        %627 = vmatprep.subr.bf16.mxu0 0
        %628 = vmatpush1.bf16.msra.mxu0 0
        %629 = vmatprep.subr.bf16.mxu0 0
        %630 = vmatpush1.bf16.msra.mxu0 0
        %631 = vmatprep.subr.bf16.mxu0 0
        %632 = vmatpush1.bf16.msra.mxu0 0
        %633 = vmatprep.subr.bf16.mxu0 0
        %634 = vmatpush1.bf16.msra.mxu0 0
        %635 = vmatprep.subr.bf16.mxu0 0
        %636 = vmatpush1.bf16.msra.mxu0 0
        %637 = vmatprep.subr.bf16.mxu0 0
        %638 = vmatpush1.bf16.msra.mxu0 0
        %639 = vmatprep.mubr.bf16.mxu0 0
        %640 = vmatmul.mubr.bf16.gmra.mrb[0].mxu0 %v605
        %v641 = vpop.f32.mrb[0].mxu0
        %v642 = vadd.f32 %v591, %v641
        %v643 = vpop.f32.mrb[0].mxu0
        %v644 = vpop.f32.mrb[0].mxu0
        %v645 = vpop.f32.mrb[0].mxu0
        %646 = vdwg.mxu0
        %648 = vrot.lane.b32.xlu0 %v642, 120
        %v649 = vpop.permute.xlu0 %648
        %651 = vrot.lane.b32.xlu0 %v642, 112
        %v652 = vpop.permute.xlu0 %651
        %654 = vrot.lane.b32.xlu0 %v642, 104
        %v655 = vpop.permute.xlu0 %654
        %v657 = vlaneseq
        %v658 = vand.u32 %v657, 127
        %s659 = sld [smem:[#allocation3 + %s30]]
        %v660 = vstv %s659
        %vm661 = vcmp.lt.s32.totalorder %v658, %v660
        %v662 = vpack.c.bf16 %v642, %v642
        %v663 = vpack.c.bf16 %v649, %v649
        %v664 = vpack.c.bf16 %v652, %v652
        %v665 = vpack.c.bf16 %v655, %v655
        %667 = vrot.lane.b32.xlu0 %v662, 96
        %v668 = vpop.permute.xlu0 %667
        %vm669 = vcmask 64512
        %v671 = vsel %vm669, %v662, 0
        %v674 = vsel %vm669, %v668, 0
        %676 = vmatprep.subr.bf16.mxu0 0
        %677 = vmatpush1.bf16.xpose.msra.mxu0 %v674
        %678 = vmatprep.subr.bf16.mxu0 0
        %679 = vmatpush1.bf16.xpose.msra.mxu0 0
        %680 = vmatprep.subr.bf16.mxu0 0
        %681 = vmatpush1.bf16.xpose.msra.mxu0 0
        %682 = vmatprep.subr.bf16.mxu0 0
        %683 = vmatpush1.bf16.xpose.msra.mxu0 0
        %684 = vmatprep.subr.bf16.mxu0 0
        %685 = vmatpush1.bf16.xpose.msra.mxu0 0
        %686 = vmatprep.subr.bf16.mxu0 0
        %687 = vmatpush1.bf16.xpose.msra.mxu0 0
        %688 = vmatprep.subr.bf16.mxu0 0
        %689 = vmatpush1.bf16.xpose.msra.mxu0 0
        %690 = vmatprep.subr.bf16.mxu0 0
        %691 = vmatpush1.bf16.xpose.msra.mxu0 0
        %692 = vmatprep.subr.bf16.mxu0 0
        %693 = vmatpush1.bf16.xpose.msra.mxu0 0
        %694 = vmatprep.subr.bf16.mxu0 0
        %695 = vmatpush1.bf16.xpose.msra.mxu0 0
        %696 = vmatprep.subr.bf16.mxu0 0
        %697 = vmatpush1.bf16.xpose.msra.mxu0 0
        %698 = vmatprep.subr.bf16.mxu0 0
        %699 = vmatpush1.bf16.xpose.msra.mxu0 0
        %700 = vmatprep.subr.bf16.mxu0 0
        %701 = vmatpush1.bf16.xpose.msra.mxu0 0
        %702 = vmatprep.subr.bf16.mxu0 0
        %703 = vmatpush1.bf16.xpose.msra.mxu0 0
        %704 = vmatprep.subr.bf16.mxu0 0
        %705 = vmatpush1.bf16.xpose.msra.mxu0 0
        %706 = vmatprep.subr.bf16.mxu0 0
        %707 = vmatpush1.bf16.xpose.msra.mxu0 0
        %708 = vmatprep.mubr.bf16.mxu0 0
        %709 = vmatmul.mubr.bf16.gmra.mrb[0].mxu0 %v671
        %v710 = vpop.f32.mrb[0].mxu0
        %v711 = vadd.f32 0.0, %v710
        %v712 = vpop.f32.mrb[0].mxu0
        %v713 = vpop.f32.mrb[0].mxu0
        %v714 = vpop.f32.mrb[0].mxu0
        %715 = vdwg.mxu0
        %717 = vrot.lane.b32.xlu0 %v663, 96
        %v718 = vpop.permute.xlu0 %717
        %v720 = vsel %vm669, %v663, 0
        %v723 = vsel %vm669, %v718, 0
        %725 = vmatprep.subr.bf16.mxu0 0
        %726 = vmatpush1.bf16.xpose.msra.mxu0 %v723
        %727 = vmatprep.subr.bf16.mxu0 0
        %728 = vmatpush1.bf16.xpose.msra.mxu0 0
        %729 = vmatprep.subr.bf16.mxu0 0
        %730 = vmatpush1.bf16.xpose.msra.mxu0 0
        %731 = vmatprep.subr.bf16.mxu0 0
        %732 = vmatpush1.bf16.xpose.msra.mxu0 0
        %733 = vmatprep.subr.bf16.mxu0 0
        %734 = vmatpush1.bf16.xpose.msra.mxu0 0
        %735 = vmatprep.subr.bf16.mxu0 0
        %736 = vmatpush1.bf16.xpose.msra.mxu0 0
        %737 = vmatprep.subr.bf16.mxu0 0
        %738 = vmatpush1.bf16.xpose.msra.mxu0 0
        %739 = vmatprep.subr.bf16.mxu0 0
        %740 = vmatpush1.bf16.xpose.msra.mxu0 0
        %741 = vmatprep.subr.bf16.mxu0 0
        %742 = vmatpush1.bf16.xpose.msra.mxu0 0
        %743 = vmatprep.subr.bf16.mxu0 0
        %744 = vmatpush1.bf16.xpose.msra.mxu0 0
        %745 = vmatprep.subr.bf16.mxu0 0
        %746 = vmatpush1.bf16.xpose.msra.mxu0 0
        %747 = vmatprep.subr.bf16.mxu0 0
        %748 = vmatpush1.bf16.xpose.msra.mxu0 0
        %749 = vmatprep.subr.bf16.mxu0 0
        %750 = vmatpush1.bf16.xpose.msra.mxu0 0
        %751 = vmatprep.subr.bf16.mxu0 0
        %752 = vmatpush1.bf16.xpose.msra.mxu0 0
        %753 = vmatprep.subr.bf16.mxu0 0
        %754 = vmatpush1.bf16.xpose.msra.mxu0 0
        %755 = vmatprep.subr.bf16.mxu0 0
        %756 = vmatpush1.bf16.xpose.msra.mxu0 0
        %757 = vmatprep.mubr.bf16.mxu0 0
        %758 = vmatmul.mubr.bf16.gmra.mrb[0].mxu0 %v720
        %v759 = vpop.f32.mrb[0].mxu0
        %v760 = vadd.f32 0.0, %v759
        %v761 = vpop.f32.mrb[0].mxu0
        %v762 = vpop.f32.mrb[0].mxu0
        %v763 = vpop.f32.mrb[0].mxu0
        %764 = vdwg.mxu0
        %766 = vrot.lane.b32.xlu0 %v664, 96
        %v767 = vpop.permute.xlu0 %766
        %v769 = vsel %vm669, %v664, 0
        %v772 = vsel %vm669, %v767, 0
        %774 = vmatprep.subr.bf16.mxu0 0
        %775 = vmatpush1.bf16.xpose.msra.mxu0 %v772
        %776 = vmatprep.subr.bf16.mxu0 0
        %777 = vmatpush1.bf16.xpose.msra.mxu0 0
        %778 = vmatprep.subr.bf16.mxu0 0
        %779 = vmatpush1.bf16.xpose.msra.mxu0 0
        %780 = vmatprep.subr.bf16.mxu0 0
        %781 = vmatpush1.bf16.xpose.msra.mxu0 0
        %782 = vmatprep.subr.bf16.mxu0 0
        %783 = vmatpush1.bf16.xpose.msra.mxu0 0
        %784 = vmatprep.subr.bf16.mxu0 0
        %785 = vmatpush1.bf16.xpose.msra.mxu0 0
        %786 = vmatprep.subr.bf16.mxu0 0
        %787 = vmatpush1.bf16.xpose.msra.mxu0 0
        %788 = vmatprep.subr.bf16.mxu0 0
        %789 = vmatpush1.bf16.xpose.msra.mxu0 0
        %790 = vmatprep.subr.bf16.mxu0 0
        %791 = vmatpush1.bf16.xpose.msra.mxu0 0
        %792 = vmatprep.subr.bf16.mxu0 0
        %793 = vmatpush1.bf16.xpose.msra.mxu0 0
        %794 = vmatprep.subr.bf16.mxu0 0
        %795 = vmatpush1.bf16.xpose.msra.mxu0 0
        %796 = vmatprep.subr.bf16.mxu0 0
        %797 = vmatpush1.bf16.xpose.msra.mxu0 0
        %798 = vmatprep.subr.bf16.mxu0 0
        %799 = vmatpush1.bf16.xpose.msra.mxu0 0
        %800 = vmatprep.subr.bf16.mxu0 0
        %801 = vmatpush1.bf16.xpose.msra.mxu0 0
        %802 = vmatprep.subr.bf16.mxu0 0
        %803 = vmatpush1.bf16.xpose.msra.mxu0 0
        %804 = vmatprep.subr.bf16.mxu0 0
        %805 = vmatpush1.bf16.xpose.msra.mxu0 0
        %806 = vmatprep.mubr.bf16.mxu0 0
        %807 = vmatmul.mubr.bf16.gmra.mrb[0].mxu0 %v769
        %v808 = vpop.f32.mrb[0].mxu0
        %v809 = vadd.f32 0.0, %v808
        %v810 = vpop.f32.mrb[0].mxu0
        %v811 = vpop.f32.mrb[0].mxu0
        %v812 = vpop.f32.mrb[0].mxu0
        %813 = vdwg.mxu0
        %815 = vrot.lane.b32.xlu0 %v665, 96
        %v816 = vpop.permute.xlu0 %815
        %v818 = vsel %vm669, %v665, 0
        %v821 = vsel %vm669, %v816, 0
        %823 = vmatprep.subr.bf16.mxu0 0
        %824 = vmatpush1.bf16.xpose.msra.mxu0 %v821
        %825 = vmatprep.subr.bf16.mxu0 0
        %826 = vmatpush1.bf16.xpose.msra.mxu0 0
        %827 = vmatprep.subr.bf16.mxu0 0
        %828 = vmatpush1.bf16.xpose.msra.mxu0 0
        %829 = vmatprep.subr.bf16.mxu0 0
        %830 = vmatpush1.bf16.xpose.msra.mxu0 0
        %831 = vmatprep.subr.bf16.mxu0 0
        %832 = vmatpush1.bf16.xpose.msra.mxu0 0
        %833 = vmatprep.subr.bf16.mxu0 0
        %834 = vmatpush1.bf16.xpose.msra.mxu0 0
        %835 = vmatprep.subr.bf16.mxu0 0
        %836 = vmatpush1.bf16.xpose.msra.mxu0 0
        %837 = vmatprep.subr.bf16.mxu0 0
        %838 = vmatpush1.bf16.xpose.msra.mxu0 0
        %839 = vmatprep.subr.bf16.mxu0 0
        %840 = vmatpush1.bf16.xpose.msra.mxu0 0
        %841 = vmatprep.subr.bf16.mxu0 0
        %842 = vmatpush1.bf16.xpose.msra.mxu0 0
        %843 = vmatprep.subr.bf16.mxu0 0
        %844 = vmatpush1.bf16.xpose.msra.mxu0 0
        %845 = vmatprep.subr.bf16.mxu0 0
        %846 = vmatpush1.bf16.xpose.msra.mxu0 0
        %847 = vmatprep.subr.bf16.mxu0 0
        %848 = vmatpush1.bf16.xpose.msra.mxu0 0
        %849 = vmatprep.subr.bf16.mxu0 0
        %850 = vmatpush1.bf16.xpose.msra.mxu0 0
        %851 = vmatprep.subr.bf16.mxu0 0
        %852 = vmatpush1.bf16.xpose.msra.mxu0 0
        %853 = vmatprep.subr.bf16.mxu0 0
        %854 = vmatpush1.bf16.xpose.msra.mxu0 0
        %855 = vmatprep.mubr.bf16.mxu0 0
        %856 = vmatmul.mubr.bf16.gmra.mrb[0].mxu0 %v818
        %v857 = vpop.f32.mrb[0].mxu0
        %v858 = vadd.f32 0.0, %v857
        %v859 = vpop.f32.mrb[0].mxu0
        %v860 = vpop.f32.mrb[0].mxu0
        %v861 = vpop.f32.mrb[0].mxu0
        %862 = vdwg.mxu0
        %v863 = vsel %vm661, 1, 0
        %vm864 = vcmp.eq.s32.totalorder %v863, 1
        %v865 = vsel %vm864, %v711, -1e+09
        %v866 = vsel %vm864, %v760, -1e+09
        %v867 = vsel %vm864, %v809, -1e+09
        %v868 = vsel %vm864, %v858, -1e+09
        %v869 = vsel %vm669, %v865, -inf
        %870 = vmax.xlane.f32.xlu0 %v869
        %v871 = vpop.xlane.xlu0 %870
        %v872 = vsel %vm669, %v866, -inf
        %873 = vmax.xlane.f32.xlu0 %v872
        %v874 = vpop.xlane.xlu0 %873
        %v875 = vsel %vm669, %v867, -inf
        %876 = vmax.xlane.f32.xlu0 %v875
        %v877 = vpop.xlane.xlu0 %876
        %v878 = vsel %vm669, %v868, -inf
        %879 = vmax.xlane.f32.xlu0 %v878
        %v880 = vpop.xlane.xlu0 %879
        %v881 = vsub.f32 %v865, %v871
        %v882 = vsub.f32 %v866, %v874
        %v883 = vsub.f32 %v867, %v877
        %v884 = vsub.f32 %v868, %v880
        %v885 = vmul.f32 %v881, 1.442695
        %v886 = vpow.pop %v885
        %v887 = vmul.f32 %v882, 1.442695
        %v888 = vpow.pop %v887
        %v889 = vmul.f32 %v883, 1.442695
        %v890 = vpow.pop %v889
        %v891 = vmul.f32 %v884, 1.442695
        %v892 = vpow.pop %v891
        %v893 = vsel %vm669, %v886, 0.0
        %894 = vadd.xlane.f32.xlu0 %v893
        %v895 = vpop.xlane.xlu0 %894
        %v896 = vsel %vm669, %v888, 0.0
        %897 = vadd.xlane.f32.xlu0 %v896
        %v898 = vpop.xlane.xlu0 %897
        %v899 = vsel %vm669, %v890, 0.0
        %900 = vadd.xlane.f32.xlu0 %v899
        %v901 = vpop.xlane.xlu0 %900
        %v902 = vsel %vm669, %v892, 0.0
        %903 = vadd.xlane.f32.xlu0 %v902
        %v904 = vpop.xlane.xlu0 %903
        %v905 = vrcp.pop %v895
        %v906 = vrcp.pop %v898
        %v907 = vrcp.pop %v901
        %v908 = vrcp.pop %v904
        %v909 = vmul.f32 %v886, %v905
        %v910 = vmul.f32 %v888, %v906
        %v911 = vmul.f32 %v890, %v907
        %v912 = vmul.f32 %v892, %v908
        %v913 = vsel %vm864, %v909, 0.0
        %v914 = vsel %vm864, %v910, 0.0
        %v915 = vsel %vm864, %v911, 0.0
        %v916 = vsel %vm864, %v912, 0.0
        %v917 = vpack.c.bf16 %v913, %v913
        %v918 = vpack.c.bf16 %v914, %v914
        %v919 = vpack.c.bf16 %v915, %v915
        %v920 = vpack.c.bf16 %v916, %v916
        %921 = vrot.lane.b32.xlu0 %v662, 64
        %v922 = vpop.permute.xlu0 %921
        %v924 = vsel %vm669, %v917, 0
        %vm926 = vcmask 1043456
        %v928 = vsel %vm926, %v922, 0
        %930 = vmatprep.subr.bf16.mxu0 0
        %931 = vmatpush1.bf16.msra.mxu0 %v928
        %932 = vmatprep.subr.bf16.mxu0 0
        %933 = vmatpush1.bf16.msra.mxu0 0
        %934 = vmatprep.subr.bf16.mxu0 0
        %935 = vmatpush1.bf16.msra.mxu0 0
        %936 = vmatprep.subr.bf16.mxu0 0
        %937 = vmatpush1.bf16.msra.mxu0 0
        %938 = vmatprep.subr.bf16.mxu0 0
        %939 = vmatpush1.bf16.msra.mxu0 0
        %940 = vmatprep.subr.bf16.mxu0 0
        %941 = vmatpush1.bf16.msra.mxu0 0
        %942 = vmatprep.subr.bf16.mxu0 0
        %943 = vmatpush1.bf16.msra.mxu0 0
        %944 = vmatprep.subr.bf16.mxu0 0
        %945 = vmatpush1.bf16.msra.mxu0 0
        %946 = vmatprep.subr.bf16.mxu0 0
        %947 = vmatpush1.bf16.msra.mxu0 0
        %948 = vmatprep.subr.bf16.mxu0 0
        %949 = vmatpush1.bf16.msra.mxu0 0
        %950 = vmatprep.subr.bf16.mxu0 0
        %951 = vmatpush1.bf16.msra.mxu0 0
        %952 = vmatprep.subr.bf16.mxu0 0
        %953 = vmatpush1.bf16.msra.mxu0 0
        %954 = vmatprep.subr.bf16.mxu0 0
        %955 = vmatpush1.bf16.msra.mxu0 0
        %956 = vmatprep.subr.bf16.mxu0 0
        %957 = vmatpush1.bf16.msra.mxu0 0
        %958 = vmatprep.subr.bf16.mxu0 0
        %959 = vmatpush1.bf16.msra.mxu0 0
        %960 = vmatprep.subr.bf16.mxu0 0
        %961 = vmatpush1.bf16.msra.mxu0 0
        %962 = vmatprep.mubr.bf16.mxu0 0
        %963 = vmatmul.mubr.bf16.gmra.mrb[0].mxu0 %v924
        %v964 = vpop.f32.mrb[0].mxu0
        %v965 = vadd.f32 0.0, %v964
        %v966 = vpop.f32.mrb[0].mxu0
        %v967 = vpop.f32.mrb[0].mxu0
        %v968 = vpop.f32.mrb[0].mxu0
        %969 = vdwg.mxu0
        %970 = vrot.lane.b32.xlu0 %v663, 64
        %v971 = vpop.permute.xlu0 %970
        %v973 = vsel %vm669, %v918, 0
        %v976 = vsel %vm926, %v971, 0
        %978 = vmatprep.subr.bf16.mxu0 0
        %979 = vmatpush1.bf16.msra.mxu0 %v976
        %980 = vmatprep.subr.bf16.mxu0 0
        %981 = vmatpush1.bf16.msra.mxu0 0
        %982 = vmatprep.subr.bf16.mxu0 0
        %983 = vmatpush1.bf16.msra.mxu0 0
        %984 = vmatprep.subr.bf16.mxu0 0
        %985 = vmatpush1.bf16.msra.mxu0 0
        %986 = vmatprep.subr.bf16.mxu0 0
        %987 = vmatpush1.bf16.msra.mxu0 0
        %988 = vmatprep.subr.bf16.mxu0 0
        %989 = vmatpush1.bf16.msra.mxu0 0
        %990 = vmatprep.subr.bf16.mxu0 0
        %991 = vmatpush1.bf16.msra.mxu0 0
        %992 = vmatprep.subr.bf16.mxu0 0
        %993 = vmatpush1.bf16.msra.mxu0 0
        %994 = vmatprep.subr.bf16.mxu0 0
        %995 = vmatpush1.bf16.msra.mxu0 0
        %996 = vmatprep.subr.bf16.mxu0 0
        %997 = vmatpush1.bf16.msra.mxu0 0
        %998 = vmatprep.subr.bf16.mxu0 0
        %999 = vmatpush1.bf16.msra.mxu0 0
        %1000 = vmatprep.subr.bf16.mxu0 0
        %1001 = vmatpush1.bf16.msra.mxu0 0
        %1002 = vmatprep.subr.bf16.mxu0 0
        %1003 = vmatpush1.bf16.msra.mxu0 0
        %1004 = vmatprep.subr.bf16.mxu0 0
        %1005 = vmatpush1.bf16.msra.mxu0 0
        %1006 = vmatprep.subr.bf16.mxu0 0
        %1007 = vmatpush1.bf16.msra.mxu0 0
        %1008 = vmatprep.subr.bf16.mxu0 0
        %1009 = vmatpush1.bf16.msra.mxu0 0
        %1010 = vmatprep.mubr.bf16.mxu0 0
        %1011 = vmatmul.mubr.bf16.gmra.mrb[0].mxu0 %v973
        %v1012 = vpop.f32.mrb[0].mxu0
        %v1013 = vadd.f32 0.0, %v1012
        %v1014 = vpop.f32.mrb[0].mxu0
        %v1015 = vpop.f32.mrb[0].mxu0
        %v1016 = vpop.f32.mrb[0].mxu0
        %1017 = vdwg.mxu0
        %1018 = vrot.lane.b32.xlu0 %v664, 64
        %v1019 = vpop.permute.xlu0 %1018
        %v1021 = vsel %vm669, %v919, 0
        %v1024 = vsel %vm926, %v1019, 0
        %1026 = vmatprep.subr.bf16.mxu0 0
        %1027 = vmatpush1.bf16.msra.mxu0 %v1024
        %1028 = vmatprep.subr.bf16.mxu0 0
        %1029 = vmatpush1.bf16.msra.mxu0 0
        %1030 = vmatprep.subr.bf16.mxu0 0
        %1031 = vmatpush1.bf16.msra.mxu0 0
        %1032 = vmatprep.subr.bf16.mxu0 0
        %1033 = vmatpush1.bf16.msra.mxu0 0
        %1034 = vmatprep.subr.bf16.mxu0 0
        %1035 = vmatpush1.bf16.msra.mxu0 0
        %1036 = vmatprep.subr.bf16.mxu0 0
        %1037 = vmatpush1.bf16.msra.mxu0 0
        %1038 = vmatprep.subr.bf16.mxu0 0
        %1039 = vmatpush1.bf16.msra.mxu0 0
        %1040 = vmatprep.subr.bf16.mxu0 0
        %1041 = vmatpush1.bf16.msra.mxu0 0
        %1042 = vmatprep.subr.bf16.mxu0 0
        %1043 = vmatpush1.bf16.msra.mxu0 0
        %1044 = vmatprep.subr.bf16.mxu0 0
        %1045 = vmatpush1.bf16.msra.mxu0 0
        %1046 = vmatprep.subr.bf16.mxu0 0
        %1047 = vmatpush1.bf16.msra.mxu0 0
        %1048 = vmatprep.subr.bf16.mxu0 0
        %1049 = vmatpush1.bf16.msra.mxu0 0
        %1050 = vmatprep.subr.bf16.mxu0 0
        %1051 = vmatpush1.bf16.msra.mxu0 0
        %1052 = vmatprep.subr.bf16.mxu0 0
        %1053 = vmatpush1.bf16.msra.mxu0 0
        %1054 = vmatprep.subr.bf16.mxu0 0
        %1055 = vmatpush1.bf16.msra.mxu0 0
        %1056 = vmatprep.subr.bf16.mxu0 0
        %1057 = vmatpush1.bf16.msra.mxu0 0
        %1058 = vmatprep.mubr.bf16.mxu0 0
        %1059 = vmatmul.mubr.bf16.gmra.mrb[0].mxu0 %v1021
        %v1060 = vpop.f32.mrb[0].mxu0
        %v1061 = vadd.f32 0.0, %v1060
        %v1062 = vpop.f32.mrb[0].mxu0
        %v1063 = vpop.f32.mrb[0].mxu0
        %v1064 = vpop.f32.mrb[0].mxu0
        %1065 = vdwg.mxu0
        %1066 = vrot.lane.b32.xlu0 %v665, 64
        %v1067 = vpop.permute.xlu0 %1066
        %v1069 = vsel %vm669, %v920, 0
        %v1072 = vsel %vm926, %v1067, 0
        %1074 = vmatprep.subr.bf16.mxu0 0
        %1075 = vmatpush1.bf16.msra.mxu0 %v1072
        %1076 = vmatprep.subr.bf16.mxu0 0
        %1077 = vmatpush1.bf16.msra.mxu0 0
        %1078 = vmatprep.subr.bf16.mxu0 0
        %1079 = vmatpush1.bf16.msra.mxu0 0
        %1080 = vmatprep.subr.bf16.mxu0 0
        %1081 = vmatpush1.bf16.msra.mxu0 0
        %1082 = vmatprep.subr.bf16.mxu0 0
        %1083 = vmatpush1.bf16.msra.mxu0 0
        %1084 = vmatprep.subr.bf16.mxu0 0
        %1085 = vmatpush1.bf16.msra.mxu0 0
        %1086 = vmatprep.subr.bf16.mxu0 0
        %1087 = vmatpush1.bf16.msra.mxu0 0
        %1088 = vmatprep.subr.bf16.mxu0 0
        %1089 = vmatpush1.bf16.msra.mxu0 0
        %1090 = vmatprep.subr.bf16.mxu0 0
        %1091 = vmatpush1.bf16.msra.mxu0 0
        %1092 = vmatprep.subr.bf16.mxu0 0
        %1093 = vmatpush1.bf16.msra.mxu0 0
        %1094 = vmatprep.subr.bf16.mxu0 0
        %1095 = vmatpush1.bf16.msra.mxu0 0
        %1096 = vmatprep.subr.bf16.mxu0 0
        %1097 = vmatpush1.bf16.msra.mxu0 0
        %1098 = vmatprep.subr.bf16.mxu0 0
        %1099 = vmatpush1.bf16.msra.mxu0 0
        %1100 = vmatprep.subr.bf16.mxu0 0
        %1101 = vmatpush1.bf16.msra.mxu0 0
        %1102 = vmatprep.subr.bf16.mxu0 0
        %1103 = vmatpush1.bf16.msra.mxu0 0
        %1104 = vmatprep.subr.bf16.mxu0 0
        %1105 = vmatpush1.bf16.msra.mxu0 0
        %1106 = vmatprep.mubr.bf16.mxu0 0
        %1107 = vmatmul.mubr.bf16.gmra.mrb[0].mxu0 %v1069
        %v1108 = vpop.f32.mrb[0].mxu0
        %v1109 = vadd.f32 0.0, %v1108
        %v1110 = vpop.f32.mrb[0].mxu0
        %v1111 = vpop.f32.mrb[0].mxu0
        %v1112 = vpop.f32.mrb[0].mxu0
        %1113 = vdwg.mxu0
        %1115 = vrot.lane.b32.xlu0 %v1013, 8
        %v1116 = vpop.permute.xlu0 %1115
        %1119 = vrot.lane.b32.xlu0 %v1061, 16
        %v1120 = vpop.permute.xlu0 %1119
        %1123 = vrot.lane.b32.xlu0 %v1109, 24
        %v1124 = vpop.permute.xlu0 %1123
        %v1126 = vsel %vm669, %v965, %v1116
        %vm1127 = vcmask 130048
        %v1128 = vsel %vm1127, %v1126, %v1120
        %vm1129 = vcmask 195584
        %v1130 = vsel %vm1129, %v1128, %v1124
        %v1131 = vld [vmem:[%s6] sm:$0xf]
        %v1132 = vld [vmem:[%s6 + $0x4] sm:$0xf]
        %v1133 = vld [vmem:[%s6 + $0x8] sm:$0xf]
        %v1134 = vld [vmem:[%s6 + $0xc] sm:$0xf]
        %v1135 = vpack.c.bf16 %v1130, %v1130
        %v1140 = vunpack.c.l.b16 %v1131
        %v1141 = vunpack.c.l.b16 %v1132
        %v1142 = vunpack.c.l.b16 %v1133
        %v1143 = vunpack.c.l.b16 %v1134
        %v1144 = vpack.c.b16 %v1141, %v1140
        %v1145 = vpack.c.b16 %v1143, %v1142
        %v1149 = vsel %vm381, %v1135, 0
        %1151 = vmatprep.subr.bf16.mxu0 0
        %1152 = vmatpush1.bf16.msra.mxu0 %v1144
        %1153 = vmatprep.subr.bf16.mxu0 0
        %1154 = vmatpush1.bf16.msra.mxu0 %v1145
        %1155 = vmatprep.subr.bf16.mxu0 0
        %1156 = vmatpush1.bf16.msra.mxu0 0
        %1157 = vmatprep.subr.bf16.mxu0 0
        %1158 = vmatpush1.bf16.msra.mxu0 0
        %1159 = vmatprep.subr.bf16.mxu0 0
        %1160 = vmatpush1.bf16.msra.mxu0 0
        %1161 = vmatprep.subr.bf16.mxu0 0
        %1162 = vmatpush1.bf16.msra.mxu0 0
        %1163 = vmatprep.subr.bf16.mxu0 0
        %1164 = vmatpush1.bf16.msra.mxu0 0
        %1165 = vmatprep.subr.bf16.mxu0 0
        %1166 = vmatpush1.bf16.msra.mxu0 0
        %1167 = vmatprep.subr.bf16.mxu0 0
        %1168 = vmatpush1.bf16.msra.mxu0 0
        %1169 = vmatprep.subr.bf16.mxu0 0
        %1170 = vmatpush1.bf16.msra.mxu0 0
        %1171 = vmatprep.subr.bf16.mxu0 0
        %1172 = vmatpush1.bf16.msra.mxu0 0
        %1173 = vmatprep.subr.bf16.mxu0 0
        %1174 = vmatpush1.bf16.msra.mxu0 0
        %1175 = vmatprep.subr.bf16.mxu0 0
        %1176 = vmatpush1.bf16.msra.mxu0 0
        %1177 = vmatprep.subr.bf16.mxu0 0
        %1178 = vmatpush1.bf16.msra.mxu0 0
        %1179 = vmatprep.subr.bf16.mxu0 0
        %1180 = vmatpush1.bf16.msra.mxu0 0
        %1181 = vmatprep.subr.bf16.mxu0 0
        %1182 = vmatpush1.bf16.msra.mxu0 0
        %1183 = vmatprep.mubr.bf16.mxu0 0
        %1184 = vmatmul.mubr.bf16.gmra.mrb[0].mxu0 %v1149
        %v1185 = vpop.f32.mrb[0].mxu0
        %v1186 = vadd.f32 0.0, %v1185
        %v1187 = vpop.f32.mrb[0].mxu0
        %v1188 = vpop.f32.mrb[0].mxu0
        %v1189 = vpop.f32.mrb[0].mxu0
        %1190 = vdwg.mxu0
        %v1191 = vadd.f32 %v559, %v1186
        %v1192 = vlaneseq
        %v1193 = vshrl.u32 %v1192, 7
        %v1194 = vsub.s32 7, %v1193
        %v1195 = vrot.slane %v376, %v1194
        %v1196 = vadd.f32 %v1191, %v1195
        %v1197 = vsel %vm381, %v1196, 0.0
        %1198 = vadd.xlane.f32.xlu0 %v1197
        %v1199 = vpop.xlane.xlu0 %1198
        %v1200 = vmul.f32 %v1199, %v385
        %v1201 = vsub.f32 %v1196, %v1200
        %v1202 = vmul.f32 %v1201, %v1201
        %v1203 = vsel %vm381, %v1202, 0.0
        %1204 = vadd.xlane.f32.xlu0 %v1203
        %v1205 = vpop.xlane.xlu0 %1204
        %v1206 = vmul.f32 %v1205, %v385
        %v1207 = vadd.f32 %v1206, 1e-12
        %v1208 = vrsqrt.pop %v1207
        %v1209 = vmul.f32 %v1201, %v1208
        %v1210 = vlaneseq
        %v1211 = vshrl.u32 %v1210, 7
        %v1212 = vsub.s32 0, %v1211
        %v1213 = vrot.slane %v377, %v1212
        %v1214 = vmul.f32 %v1209, %v1213
        %v1215 = vlaneseq
        %v1216 = vshrl.u32 %v1215, 7
        %v1217 = vsub.s32 1, %v1216
        %v1218 = vrot.slane %v377, %v1217
        %v1219 = vadd.f32 %v1214, %v1218
        %v1220 = vld [vmem:[%s7] sm:$0xf]
        %v1221 = vld [vmem:[%s7 + $0x4] sm:$0xf]
        %v1222 = vld [vmem:[%s7 + $0x8] sm:$0xf]
        %v1223 = vld [vmem:[%s7 + $0xc] sm:$0xf]
        %v1224 = vpack.c.bf16 %v1219, %v1219
        %v1225 = vlaneseq
        %v1226 = vshrl.u32 %v1225, 7
        %v1227 = vsub.s32 2, %v1226
        %v1228 = vrot.slane %v377, %v1227
        %v1233 = vunpack.c.l.b16 %v1220
        %v1234 = vunpack.c.l.b16 %v1221
        %v1235 = vunpack.c.l.b16 %v1222
        %v1236 = vunpack.c.l.b16 %v1223
        %v1237 = vpack.c.b16 %v1234, %v1233
        %v1238 = vpack.c.b16 %v1236, %v1235
        %v1242 = vsel %vm381, %v1224, 0
        %1244 = vmatprep.subr.bf16.mxu0 0
        %1245 = vmatpush1.bf16.msra.mxu0 %v1237
        %1246 = vmatprep.subr.bf16.mxu0 0
        %1247 = vmatpush1.bf16.msra.mxu0 %v1238
        %1248 = vmatprep.subr.bf16.mxu0 0
        %1249 = vmatpush1.bf16.msra.mxu0 0
        %1250 = vmatprep.subr.bf16.mxu0 0
        %1251 = vmatpush1.bf16.msra.mxu0 0
        %1252 = vmatprep.subr.bf16.mxu0 0
        %1253 = vmatpush1.bf16.msra.mxu0 0
        %1254 = vmatprep.subr.bf16.mxu0 0
        %1255 = vmatpush1.bf16.msra.mxu0 0
        %1256 = vmatprep.subr.bf16.mxu0 0
        %1257 = vmatpush1.bf16.msra.mxu0 0
        %1258 = vmatprep.subr.bf16.mxu0 0
        %1259 = vmatpush1.bf16.msra.mxu0 0
        %1260 = vmatprep.subr.bf16.mxu0 0
        %1261 = vmatpush1.bf16.msra.mxu0 0
        %1262 = vmatprep.subr.bf16.mxu0 0
        %1263 = vmatpush1.bf16.msra.mxu0 0
        %1264 = vmatprep.subr.bf16.mxu0 0
        %1265 = vmatpush1.bf16.msra.mxu0 0
        %1266 = vmatprep.subr.bf16.mxu0 0
        %1267 = vmatpush1.bf16.msra.mxu0 0
        %1268 = vmatprep.subr.bf16.mxu0 0
        %1269 = vmatpush1.bf16.msra.mxu0 0
        %1270 = vmatprep.subr.bf16.mxu0 0
        %1271 = vmatpush1.bf16.msra.mxu0 0
        %1272 = vmatprep.subr.bf16.mxu0 0
        %1273 = vmatpush1.bf16.msra.mxu0 0
        %1274 = vmatprep.subr.bf16.mxu0 0
        %1275 = vmatpush1.bf16.msra.mxu0 0
        %1276 = vmatprep.mubr.bf16.mxu0 0
        %1277 = vmatmul.mubr.bf16.gmra.mrb[0].mxu0 %v1242
        %v1278 = vpop.f32.mrb[0].mxu0
        %v1279 = vadd.f32 %v1228, %v1278
        %v1280 = vpop.f32.mrb[0].mxu0
        %v1281 = vpop.f32.mrb[0].mxu0
        %v1282 = vpop.f32.mrb[0].mxu0
        %1283 = vdwg.mxu0
        %v1284 = vxor.u32 %v1279, 2147483648
        %v1285 = vmul.f32 %v1284, 1.442695
        %v1286 = vpow.pop %v1285
        %v1287 = vadd.f32 %v1286, 1.0
        %v1288 = vrcp.pop %v1287
        %v1289 = vmul.f32 1.0, %v1288
        %1291 = vrot.lane.b32.xlu0 %v1289, 96
        %v1292 = vpop.permute.xlu0 %1291
        %v1294 = vmul.f32 %v1279, %v1292
        %v1295 = vlaneseq
        %v1296 = vshrl.u32 %v1295, 7
        %v1297 = vsub.s32 3, %v1296
        %v1298 = vrot.slane %v377, %v1297
        %v1299 = vadd.f32 %v1298, 0.0
        %v1301 = vrot.slane %v1294, 5
        %vm1303 = vcmask 1042432
        %v1304 = vsel %vm1303, 0.0, %v1301
        %v1305 = vlaneseq
        %v1306 = vshrl.u32 %v1305, 7
        %v1307 = vsub.s32 7, %v1306
        %v1308 = vrot.slane %v378, %v1307
        %v1309 = vmul.f32 %v1304, %v1308
        %v1310 = vadd.f32 %v1299, %v1309
        %v1311 = vrot.slane %v1294, 6
        %vm1313 = vcmask 1041408
        %v1314 = vsel %vm1313, 0.0, %v1311
        %v1315 = vlaneseq
        %v1316 = vshrl.u32 %v1315, 7
        %v1317 = vsub.s32 0, %v1316
        %v1318 = vrot.slane %v379, %v1317
        %v1319 = vmul.f32 %v1314, %v1318
        %v1320 = vadd.f32 %v1310, %v1319
        %v1321 = vrot.slane %v1294, 7
        %vm1323 = vcmask 1040384
        %v1324 = vsel %vm1323, 0.0, %v1321
        %v1325 = vlaneseq
        %v1326 = vshrl.u32 %v1325, 7
        %v1327 = vsub.s32 1, %v1326
        %v1328 = vrot.slane %v379, %v1327
        %v1329 = vmul.f32 %v1324, %v1328
        %v1330 = vadd.f32 %v1320, %v1329
        %v1331 = vlaneseq
        %v1332 = vshrl.u32 %v1331, 7
        %v1333 = vsub.s32 2, %v1332
        %v1334 = vrot.slane %v379, %v1333
        %v1335 = vmul.f32 %v1294, %v1334
        %v1336 = vadd.f32 %v1330, %v1335
        %v1337 = vrot.slane %v1294, 1
        %vm1339 = vcmask 1046528
        %v1340 = vsel %vm1339, %v1337, 0.0
        %v1341 = vlaneseq
        %v1342 = vshrl.u32 %v1341, 7
        %v1343 = vsub.s32 3, %v1342
        %v1344 = vrot.slane %v379, %v1343
        %v1345 = vmul.f32 %v1340, %v1344
        %v1346 = vadd.f32 %v1336, %v1345
        %v1347 = vrot.slane %v1294, 2
        %vm1349 = vcmask 1045504
        %v1350 = vsel %vm1349, %v1347, 0.0
        %v1351 = vlaneseq
        %v1352 = vshrl.u32 %v1351, 7
        %v1353 = vsub.s32 4, %v1352
        %v1354 = vrot.slane %v379, %v1353
        %v1355 = vmul.f32 %v1350, %v1354
        %v1356 = vadd.f32 %v1346, %v1355
        %v1357 = vrot.slane %v1294, 3
        %vm1359 = vcmask 1044480
        %v1360 = vsel %vm1359, %v1357, 0.0
        %v1361 = vlaneseq
        %v1362 = vshrl.u32 %v1361, 7
        %v1363 = vsub.s32 5, %v1362
        %v1364 = vrot.slane %v379, %v1363
        %v1365 = vmul.f32 %v1360, %v1364
        %v1366 = vadd.f32 %v1356, %v1365
        %v1367 = vlaneseq
        %v1368 = vshrl.u32 %v1367, 7
        %v1369 = vsub.s32 6, %v1368
        %v1370 = vrot.slane %v377, %v1369
        %v1371 = vsub.f32 %v1366, %v1370
        %v1372 = vadd.f32 %v377, 1e-05
        %v1373 = vrsqrt.pop %v1372
        %v1374 = vlaneseq
        %v1375 = vshrl.u32 %v1374, 7
        %v1376 = vsub.s32 7, %v1375
        %v1377 = vrot.slane %v1373, %v1376
        %v1378 = vmul.f32 %v1371, %v1377
        %v1379 = vlaneseq
        %v1380 = vshrl.u32 %v1379, 7
        %v1381 = vsub.s32 4, %v1380
        %v1382 = vrot.slane %v377, %v1381
        %v1383 = vmul.f32 %v1378, %v1382
        %v1384 = vlaneseq
        %v1385 = vshrl.u32 %v1384, 7
        %v1386 = vsub.s32 5, %v1385
        %v1387 = vrot.slane %v377, %v1386
        %v1388 = vadd.f32 %v1383, %v1387
        %v1389 = vxor.u32 %v1388, 2147483648
        %v1390 = vmul.f32 %v1389, 1.442695
        %v1391 = vpow.pop %v1390
        %v1392 = vadd.f32 %v1391, 1.0
        %v1393 = vrcp.pop %v1392
        %v1394 = vmul.f32 1.0, %v1393
        %v1395 = vmul.f32 %v1388, %v1394
        %v1396 = vld [vmem:[#allocation4] sm:$0xf]
        %v1397 = vld [vmem:[#allocation4 + $0x4] sm:$0xf]
        %v1398 = vld [vmem:[#allocation4 + $0x8] sm:$0xf]
        %v1399 = vld [vmem:[#allocation4 + $0xc] sm:$0xf]
        %v1400 = vpack.c.bf16 %v1395, %v1395
        %v1405 = vunpack.c.l.b16 %v1396
        %v1406 = vunpack.c.l.b16 %v1397
        %v1407 = vunpack.c.l.b16 %v1398
        %v1408 = vunpack.c.l.b16 %v1399
        %v1409 = vpack.c.b16 %v1406, %v1405
        %v1410 = vpack.c.b16 %v1408, %v1407
        %v1414 = vsel %vm381, %v1400, 0
        %1416 = vmatprep.subr.bf16.mxu0 0
        %1417 = vmatpush1.bf16.msra.mxu0 %v1409
        %1418 = vmatprep.subr.bf16.mxu0 0
        %1419 = vmatpush1.bf16.msra.mxu0 %v1410
        %1420 = vmatprep.subr.bf16.mxu0 0
        %1421 = vmatpush1.bf16.msra.mxu0 0
        %1422 = vmatprep.subr.bf16.mxu0 0
        %1423 = vmatpush1.bf16.msra.mxu0 0
        %1424 = vmatprep.subr.bf16.mxu0 0
        %1425 = vmatpush1.bf16.msra.mxu0 0
        %1426 = vmatprep.subr.bf16.mxu0 0
        %1427 = vmatpush1.bf16.msra.mxu0 0
        %1428 = vmatprep.subr.bf16.mxu0 0
        %1429 = vmatpush1.bf16.msra.mxu0 0
        %1430 = vmatprep.subr.bf16.mxu0 0
        %1431 = vmatpush1.bf16.msra.mxu0 0
        %1432 = vmatprep.subr.bf16.mxu0 0
        %1433 = vmatpush1.bf16.msra.mxu0 0
        %1434 = vmatprep.subr.bf16.mxu0 0
        %1435 = vmatpush1.bf16.msra.mxu0 0
        %1436 = vmatprep.subr.bf16.mxu0 0
        %1437 = vmatpush1.bf16.msra.mxu0 0
        %1438 = vmatprep.subr.bf16.mxu0 0
        %1439 = vmatpush1.bf16.msra.mxu0 0
        %1440 = vmatprep.subr.bf16.mxu0 0
        %1441 = vmatpush1.bf16.msra.mxu0 0
        %1442 = vmatprep.subr.bf16.mxu0 0
        %1443 = vmatpush1.bf16.msra.mxu0 0
        %1444 = vmatprep.subr.bf16.mxu0 0
        %1445 = vmatpush1.bf16.msra.mxu0 0
        %1446 = vmatprep.subr.bf16.mxu0 0
        %1447 = vmatpush1.bf16.msra.mxu0 0
        %1448 = vmatprep.mubr.bf16.mxu0 0
        %1449 = vmatmul.mubr.bf16.gmra.mrb[0].mxu0 %v1414
        %v1450 = vpop.f32.mrb[0].mxu0
        %v1451 = vadd.f32 0.0, %v1450
        %v1452 = vpop.f32.mrb[0].mxu0
        %v1453 = vpop.f32.mrb[0].mxu0
        %v1454 = vpop.f32.mrb[0].mxu0
        %1455 = vdwg.mxu0
        %v1456 = vadd.f32 %v1196, %v1451
        %v1457 = vlaneseq
        %v1458 = vshrl.u32 %v1457, 7
        %v1459 = vsub.s32 0, %v1458
        %v1460 = vrot.slane %v378, %v1459
        %v1461 = vadd.f32 %v1456, %v1460
        %v1462 = vsel %vm381, %v1461, 0.0
        %1463 = vadd.xlane.f32.xlu0 %v1462
        %v1464 = vpop.xlane.xlu0 %1463
        %v1465 = vmul.f32 %v1464, %v385
        %v1466 = vsub.f32 %v1461, %v1465
        %v1467 = vmul.f32 %v1466, %v1466
        %v1468 = vsel %vm381, %v1467, 0.0
        %1469 = vadd.xlane.f32.xlu0 %v1468
        %v1470 = vpop.xlane.xlu0 %1469
        %v1471 = vmul.f32 %v1470, %v385
        %v1472 = vadd.f32 %v1471, 1e-12
        %v1473 = vrsqrt.pop %v1472
        %v1474 = vmul.f32 %v1466, %v1473
        %v1475 = vlaneseq
        %v1476 = vshrl.u32 %v1475, 7
        %v1477 = vsub.s32 1, %v1476
        %v1478 = vrot.slane %v378, %v1477
        %v1479 = vmul.f32 %v1474, %v1478
        %v1480 = vlaneseq
        %v1481 = vshrl.u32 %v1480, 7
        %v1482 = vsub.s32 2, %v1481
        %v1483 = vrot.slane %v378, %v1482
        %v1484 = vadd.f32 %v1479, %v1483
        %v1485 = vld [vmem:[%s9] sm:$0xf]
        %v1486 = vld [vmem:[%s9 + $0x4] sm:$0xf]
        %v1487 = vld [vmem:[%s9 + $0x8] sm:$0xf]
        %v1488 = vld [vmem:[%s9 + $0xc] sm:$0xf]
        %v1489 = vld [vmem:[%s10] sm:$0xf]
        %v1490 = vld [vmem:[%s10 + $0x4] sm:$0xf]
        %v1491 = vld [vmem:[%s10 + $0x8] sm:$0xf]
        %v1492 = vld [vmem:[%s10 + $0xc] sm:$0xf]
        %v1493 = vld [vmem:[%s10 + $0x10] sm:$0xf]
        %v1494 = vld [vmem:[%s10 + $0x14] sm:$0xf]
        %v1495 = vld [vmem:[%s10 + $0x18] sm:$0xf]
        %v1496 = vld [vmem:[%s10 + $0x1c] sm:$0xf]
        %v1497 = vpack.c.bf16 %v1484, %v1484
        %v1498 = vlaneseq
        %v1499 = vshrl.u32 %v1498, 7
        %v1500 = vsub.s32 3, %v1499
        %v1501 = vrot.slane %v378, %v1500
        %v1506 = vunpack.c.l.b16 %v1485
        %v1507 = vunpack.c.l.b16 %v1486
        %v1508 = vunpack.c.l.b16 %v1487
        %v1509 = vunpack.c.l.b16 %v1488
        %v1510 = vpack.c.b16 %v1507, %v1506
        %v1511 = vpack.c.b16 %v1509, %v1508
        %v1515 = vsel %vm381, %v1497, 0
        %1517 = vmatprep.subr.bf16.mxu0 0
        %1518 = vmatpush1.bf16.msra.mxu0 %v1510
        %1519 = vmatprep.subr.bf16.mxu0 0
        %1520 = vmatpush1.bf16.msra.mxu0 %v1511
        %1521 = vmatprep.subr.bf16.mxu0 0
        %1522 = vmatpush1.bf16.msra.mxu0 0
        %1523 = vmatprep.subr.bf16.mxu0 0
        %1524 = vmatpush1.bf16.msra.mxu0 0
        %1525 = vmatprep.subr.bf16.mxu0 0
        %1526 = vmatpush1.bf16.msra.mxu0 0
        %1527 = vmatprep.subr.bf16.mxu0 0
        %1528 = vmatpush1.bf16.msra.mxu0 0
        %1529 = vmatprep.subr.bf16.mxu0 0
        %1530 = vmatpush1.bf16.msra.mxu0 0
        %1531 = vmatprep.subr.bf16.mxu0 0
        %1532 = vmatpush1.bf16.msra.mxu0 0
        %1533 = vmatprep.subr.bf16.mxu0 0
        %1534 = vmatpush1.bf16.msra.mxu0 0
        %1535 = vmatprep.subr.bf16.mxu0 0
        %1536 = vmatpush1.bf16.msra.mxu0 0
        %1537 = vmatprep.subr.bf16.mxu0 0
        %1538 = vmatpush1.bf16.msra.mxu0 0
        %1539 = vmatprep.subr.bf16.mxu0 0
        %1540 = vmatpush1.bf16.msra.mxu0 0
        %1541 = vmatprep.subr.bf16.mxu0 0
        %1542 = vmatpush1.bf16.msra.mxu0 0
        %1543 = vmatprep.subr.bf16.mxu0 0
        %1544 = vmatpush1.bf16.msra.mxu0 0
        %1545 = vmatprep.subr.bf16.mxu0 0
        %1546 = vmatpush1.bf16.msra.mxu0 0
        %1547 = vmatprep.subr.bf16.mxu0 0
        %1548 = vmatpush1.bf16.msra.mxu0 0
        %1549 = vmatprep.mubr.bf16.mxu0 0
        %1550 = vmatmul.mubr.bf16.gmra.mrb[0].mxu0 %v1515
        %v1551 = vpop.f32.mrb[0].mxu0
        %v1552 = vadd.f32 %v1501, %v1551
        %v1553 = vpop.f32.mrb[0].mxu0
        %v1554 = vpop.f32.mrb[0].mxu0
        %v1555 = vpop.f32.mrb[0].mxu0
        %1556 = vdwg.mxu0
        %v1557 = vxor.u32 %v1552, 2147483648
        %v1558 = vmul.f32 %v1557, 1.442695
        %v1559 = vpow.pop %v1558
        %v1560 = vadd.f32 %v1559, 1.0
        %v1561 = vrcp.pop %v1560
        %v1562 = vmul.f32 1.0, %v1561
        %v1563 = vmul.f32 %v1552, %v1562
        %v1564 = vpack.c.bf16 %v1563, %v1563
        %v1565 = vlaneseq
        %v1566 = vshrl.u32 %v1565, 7
        %v1567 = vsub.s32 4, %v1566
        %v1568 = vrot.slane %v378, %v1567
        %v1577 = vunpack.c.l.b16 %v1489
        %v1578 = vunpack.c.l.b16 %v1490
        %v1579 = vunpack.c.l.b16 %v1491
        %v1580 = vunpack.c.l.b16 %v1492
        %v1581 = vunpack.c.l.b16 %v1493
        %v1582 = vunpack.c.l.b16 %v1494
        %v1583 = vunpack.c.l.b16 %v1495
        %v1584 = vunpack.c.l.b16 %v1496
        %v1585 = vpack.c.b16 %v1578, %v1577
        %v1586 = vpack.c.b16 %v1580, %v1579
        %v1587 = vpack.c.b16 %v1582, %v1581
        %v1588 = vpack.c.b16 %v1584, %v1583
        %v1594 = vsel %vm514, %v1564, 0
        %1596 = vmatprep.subr.bf16.mxu0 0
        %1597 = vmatpush1.bf16.msra.mxu0 %v1585
        %1598 = vmatprep.subr.bf16.mxu0 0
        %1599 = vmatpush1.bf16.msra.mxu0 %v1586
        %1600 = vmatprep.subr.bf16.mxu0 0
        %1601 = vmatpush1.bf16.msra.mxu0 %v1587
        %1602 = vmatprep.subr.bf16.mxu0 0
        %1603 = vmatpush1.bf16.msra.mxu0 %v1588
        %1604 = vmatprep.subr.bf16.mxu0 0
        %1605 = vmatpush1.bf16.msra.mxu0 0
        %1606 = vmatprep.subr.bf16.mxu0 0
        %1607 = vmatpush1.bf16.msra.mxu0 0
        %1608 = vmatprep.subr.bf16.mxu0 0
        %1609 = vmatpush1.bf16.msra.mxu0 0
        %1610 = vmatprep.subr.bf16.mxu0 0
        %1611 = vmatpush1.bf16.msra.mxu0 0
        %1612 = vmatprep.subr.bf16.mxu0 0
        %1613 = vmatpush1.bf16.msra.mxu0 0
        %1614 = vmatprep.subr.bf16.mxu0 0
        %1615 = vmatpush1.bf16.msra.mxu0 0
        %1616 = vmatprep.subr.bf16.mxu0 0
        %1617 = vmatpush1.bf16.msra.mxu0 0
        %1618 = vmatprep.subr.bf16.mxu0 0
        %1619 = vmatpush1.bf16.msra.mxu0 0
        %1620 = vmatprep.subr.bf16.mxu0 0
        %1621 = vmatpush1.bf16.msra.mxu0 0
        %1622 = vmatprep.subr.bf16.mxu0 0
        %1623 = vmatpush1.bf16.msra.mxu0 0
        %1624 = vmatprep.subr.bf16.mxu0 0
        %1625 = vmatpush1.bf16.msra.mxu0 0
        %1626 = vmatprep.subr.bf16.mxu0 0
        %1627 = vmatpush1.bf16.msra.mxu0 0
        %1628 = vmatprep.mubr.bf16.mxu0 0
        %1629 = vmatmul.mubr.bf16.gmra.mrb[0].mxu0 %v1594
        %v1630 = vpop.f32.mrb[0].mxu0
        %v1631 = vadd.f32 %v1568, %v1630
        %v1632 = vpop.f32.mrb[0].mxu0
        %v1633 = vpop.f32.mrb[0].mxu0
        %v1634 = vpop.f32.mrb[0].mxu0
        %1635 = vdwg.mxu0
        %v1636 = vmul.f32 %v1631, 0.5
        %v1637 = vadd.f32 %v1461, %v1636
        %v1638 = vsel %vm381, %v1637, 0.0
        %1639 = vadd.xlane.f32.xlu0 %v1638
        %v1640 = vpop.xlane.xlu0 %1639
        %v1641 = vmul.f32 %v1640, %v385
        %v1642 = vsub.f32 %v1637, %v1641
        %v1643 = vmul.f32 %v1642, %v1642
        %v1644 = vsel %vm381, %v1643, 0.0
        %1645 = vadd.xlane.f32.xlu0 %v1644
        %v1646 = vpop.xlane.xlu0 %1645
        %v1647 = vmul.f32 %v1646, %v385
        %v1648 = vadd.f32 %v1647, 1e-12
        %v1649 = vrsqrt.pop %v1648
        %v1650 = vmul.f32 %v1642, %v1649
        %v1651 = vlaneseq
        %v1652 = vshrl.u32 %v1651, 7
        %v1653 = vsub.s32 5, %v1652
        %v1654 = vrot.slane %v378, %v1653
        %v1655 = vmul.f32 %v1650, %v1654
        %v1656 = vlaneseq
        %v1657 = vshrl.u32 %v1656, 7
        %v1658 = vsub.s32 6, %v1657
        %v1659 = vrot.slane %v378, %v1658
        %v1660 = vadd.f32 %v1655, %v1659
        %1661 = vst.msk [vmem:[%s370] sm:$0xff] %vm381, %v1660
        %s1662 = sand.u32 %s253, 1
        %s1663 = scalar_lea.sflag [#allocation6], %s1662
        %s1664 = sand.u32 %s253, 1
        %s1665 = smul.addr %s1664, 8
        %s1666 = scalar_lea.vmem [#allocation7], %s1665
        // Predicated region
        $region65: #{tpu_custom_call.1} parent=59 // pred_check
          %p1667 = pneg %p263
        $region66: #{tpu_custom_call.1} parent=59 // pred_check_branch
          %1669 = sbr.rel (%p1667) target = $region68
        $region67: #{tpu_custom_call.1} parent=59 // pred_region
          %s1671 = ssub.s32 128, 128
          %1672 = vsyncadd %s1663, %s1671
          %s1673 = smul.addr %s30, 128
          %s1674 = scalar_lea.hbm %s11, %s1673
          %s1676 = sshll.u32 %s1666, 4
          %s1677 = int_to_ptr.vmem [resolvable:$true] %s1676
          %1679 = dma.vmem_to_hbm [thread:$0]  %s1677, 128, %s1674, %s1663
        $region68: #{tpu_custom_call.1} parent=59 // pred_fallthru
          _
      $region60: #{tpu_custom_call.1} parent=5 // pred_fallthru
        _
      %p1680 = scmp.le.s32.totalorder 2, %s25
      // Predicated region
      $region69: #{tpu_custom_call.1} parent=5 // pred_check
        %p1681 = pneg %p1680
      $region70: #{tpu_custom_call.1} parent=5 // pred_check_branch
        %1683 = sbr.rel (%p1681) target = $region72
      $region71: #{tpu_custom_call.1} parent=5 // pred_region
        %s1684 = ssub.s32 %s25, 2
        // Predicated region
        $region73: #{tpu_custom_call.1} parent=71 // pred_check
          %p1685 = pneg %p269
        $region74: #{tpu_custom_call.1} parent=71 // pred_check_branch
          %1687 = sbr.rel (%p1685) target = $region76
        $region75: #{tpu_custom_call.1} parent=71 // pred_region
          %s1688 = sand.u32 %s254, 1
          %s1689 = scalar_lea.sflag [#allocation6], %s1688
          %s1690 = sand.u32 %s254, 1
          %s1691 = smul.addr %s1690, 8
          %s1692 = scalar_lea.vmem [#allocation7], %s1691
          %1693 = dma.done %s1689, 128
        $region76: #{tpu_custom_call.1} parent=71 // pred_fallthru
          _
      $region72: #{tpu_custom_call.1} parent=5 // pred_fallthru
        _
    $region6: #{tpu_custom_call.1} parent=1 // loop_footer
      %s29 = sadd.s32 1, %s25
    $region7: #{tpu_custom_call.1} parent=1 // loop_footer_branch
      %24 = sbr.rel target = $region3
    $region8: #{tpu_custom_call.1} parent=1 // loop_exit
      _
    %1694 = vsyncpa [#allocation5], 1
    %s1695 = scalar_lea.sflag [#allocation5], 1
    %1696 = vsyncpa %s1695, 1
    %1697 = vsyncpa [#allocation6], 1
    %s1698 = scalar_lea.sflag [#allocation6], 1
    %1699 = vsyncpa %s1698, 1

</llo_original>
